<compile_context>
chip_gen: v7x
topology: tpu7x:2x2x1
jax: 0.10.0
libtpu: 0.0.40
codegen_flags: <defaults>
</compile_context>

<pallas_src>
import functools
import math

import jax
import jax.numpy as jnp
from jax.experimental import pallas as pl
from jax.experimental.pallas import tpu as pltpu


_VMEM_LIMIT = 64 * 1024 * 1024  # fits v7x (64 MiB physical), ample on v5e/v6e


def _round_up(x, m):
    return (x + m - 1) // m * m


# ------------------------------ Pallas kernels ------------------------------


def _conv1_kernel(col_ref, w_ref, b_ref, o_ref):
    """Conv2d(1, odim, 3, stride=2) + bias + ReLU for one (batch, phase) pair.

    col_ref: (1, 1, R, 9)  bf16  im2col patches, R = (F2+1)*(T2+1)
    w_ref:   (9, C)        bf16  packed conv1 weight
    b_ref:   (1, C)        f32
    o_ref:   (1, 1, R, C)  bf16  phase-ordered conv1 output
    """
    acc = jnp.dot(col_ref[0, 0], w_ref[...], preferred_element_type=jnp.float32)
    acc = acc + b_ref[...]
    o_ref[0, 0] = jnp.maximum(acc, 0.0).astype(o_ref.dtype)


def _conv2_linear_pe_kernel(v0, v1, v2, w2_ref, b2_ref, wl_ref, bl_ref, pe_ref,
                            o_ref, *, t2, scale):
    """Fused conv2 + ReLU + (C,F) flatten + Linear + positional encoding.

    Grid = (batch, F2); F2 is the reduction axis for the Linear contraction.
    v0/v1/v2: (1, 2, 1, T2+1, C) bf16  phase views of h1 (one per kw tap)
    w2_ref:   (9, C, C)  bf16
    b2_ref:   (1, C)     f32
    wl_ref:   (C, C)     bf16   K-slice of the permuted Linear weight
    bl_ref:   (1, C)     f32
    pe_ref:   (T2, C)    f32    positional-encoding table (shared over batch)
    o_ref:    (1, T2, C) f32    resident accumulator / final output block
    """
    f2 = pl.program_id(1)
    c = w2_ref.shape[1]
    views = (v0, v1, v2)

    # conv2 for this output-frequency column: 9 taps on the MXU, f32 acc.
    acc = jnp.zeros((t2, c), jnp.float32) + b2_ref[...]
    for kw in range(3):
        v = views[kw]
        for kh in range(3):
            a = v[0, kh % 2, 0, kh // 2:kh // 2 + t2, :]            # (T2, C)
            acc = acc + jnp.dot(a, w2_ref[kh * 3 + kw],
                                preferred_element_type=jnp.float32)
    h2_col = jnp.maximum(acc, 0.0).astype(jnp.bfloat16)             # ReLU

    # Linear contribution of this K-slice (= this h2 frequency column).
    contrib = jnp.dot(h2_col, wl_ref[...],
                      preferred_element_type=jnp.float32)           # (T2, C)

    @pl.when(f2 == 0)
    def _():
        o_ref[0] = contrib

    @pl.when(f2 > 0)
    def _():
        o_ref[0] = o_ref[0] + contrib

    @pl.when(f2 == pl.num_programs(1) - 1)
    def _():
        o_ref[0] = (o_ref[0] + bl_ref[...]) * scale + pe_ref[...]


# --------------------------------- JAX glue ----------------------------------


def sinusoidal_pe(length, d_model):
    """ESPnet PositionalEncoding table: pe[t, 2i]=sin, pe[t, 2i+1]=cos."""
    position = jnp.arange(length, dtype=jnp.float32)[:, None]
    div_term = jnp.exp(
        jnp.arange(0, d_model, 2, dtype=jnp.float32)
        * -(math.log(10000.0) / d_model))
    pe = jnp.zeros((length, d_model), dtype=jnp.float32)
    pe = pe.at[:, 0::2].set(jnp.sin(position * div_term))
    pe = pe.at[:, 1::2].set(jnp.cos(position * div_term))
    return pe


def init_params(key, idim, odim):
    k1, k2, k3, k4, k5, k6 = jax.random.split(key, 6)
    f_out = ((idim - 1) // 2 - 1) // 2
    lin_in = odim * f_out
    return {
        "w1": 0.1 * jax.random.normal(k1, (odim, 1, 3, 3), jnp.float32),
        "b1": 0.1 * jax.random.normal(k2, (odim,), jnp.float32),
        "w2": 0.05 * jax.random.normal(k3, (odim, odim, 3, 3), jnp.float32),
        "b2": 0.1 * jax.random.normal(k4, (odim,), jnp.float32),
        "wl": 0.05 * jax.random.normal(k5, (odim, lin_in), jnp.float32),
        "bl": 0.1 * jax.random.normal(k6, (odim,), jnp.float32),
    }


def conv2d_subsampling_forward(params, x, x_mask):
    """x: (B, T, idim) f32; x_mask: (B, 1, T) bool or None."""
    B, T, idim = x.shape
    odim = params["w1"].shape[0]
    T1 = (T - 3) // 2 + 1
    F1 = (idim - 3) // 2 + 1
    T2 = (T1 - 3) // 2 + 1
    F2 = (F1 - 3) // 2 + 1
    C = max(128, _round_up(odim, 128))          # lane-padded channel dim
    R = (F2 + 1) * (T2 + 1)                     # rows per (t%2, f%2) phase
    scale = math.sqrt(odim)

    # ---- conv1 operands: phase-ordered im2col (9 taps, Cin=1), bf16 --------
    xb = x.astype(jnp.bfloat16)
    taps = []
    for kh in range(3):
        for kw in range(3):
            taps.append(xb[:, kh:kh + 2 * T1:2, kw:kw + 2 * F1:2])
    p = jnp.stack(taps, axis=-1)                                  # (B,T1,F1,9)
    p = jnp.pad(p, ((0, 0), (0, 2 * (T2 + 1) - T1),
                    (0, 2 * (F2 + 1) - F1), (0, 0)))
    p = p.reshape(B, T2 + 1, 2, F2 + 1, 2, 9)                     # (b,a,pt,fb,pf,9)
    p = p.transpose(0, 4, 2, 3, 1, 5)                             # (b,pf,pt,fb,a,9)
    col1 = p.reshape(B, 4, R, 9)

    w1p = params["w1"][:, 0].transpose(1, 2, 0).reshape(9, odim)  # (kh*3+kw, co)
    w1p = jnp.pad(w1p, ((0, 0), (0, C - odim))).astype(jnp.bfloat16)
    b1p = jnp.pad(params["b1"], (0, C - odim)).reshape(1, C).astype(jnp.float32)

    ce1 = pl.CostEstimate(
        flops=2 * B * 4 * R * 9 * C, transcendentals=0,
        bytes_accessed=col1.size * 2 + B * 4 * R * C * 2 + w1p.size * 2)

    h1p = pl.pallas_call(
        _conv1_kernel,
        out_shape=jax.ShapeDtypeStruct((B, 4, R, C), jnp.bfloat16),
        grid_spec=pltpu.PrefetchScalarGridSpec(
            num_scalar_prefetch=0,
            grid=(B, 4),
            in_specs=[
                pl.BlockSpec((1, 1, R, 9), lambda b, ph: (b, ph, 0, 0)),
                pl.BlockSpec((9, C), lambda b, ph: (0, 0)),
                pl.BlockSpec((1, C), lambda b, ph: (0, 0)),
            ],
            out_specs=pl.BlockSpec((1, 1, R, C), lambda b, ph: (b, ph, 0, 0)),
        ),
        compiler_params=pltpu.CompilerParams(
            dimension_semantics=("parallel", "parallel"),
            vmem_limit_bytes=_VMEM_LIMIT),
        cost_estimate=ce1,
    )(col1, w1p, b1p)
    # (B, f%2 * 2 + t%2, fb, a, C): phase-decomposed conv1 output (free reshape).
    h1p = h1p.reshape(B, 4, F2 + 1, T2 + 1, C)

    # ---- fused conv2 + ReLU + flatten + Linear + positional encoding -------
    w2p = params["w2"].transpose(2, 3, 1, 0).reshape(9, odim, odim)  # (tap,ci,co)
    w2p = jnp.pad(w2p, ((0, 0), (0, C - odim), (0, C - odim))).astype(jnp.bfloat16)
    b2p = jnp.pad(params["b2"], (0, C - odim)).reshape(1, C).astype(jnp.float32)

    # torch flattens h2 as (c, f); permute Linear-weight rows to our (f, c_pad)
    # layout instead of transposing h2 (saves a full HBM pass over h2).
    wl = params["wl"].reshape(odim, odim, F2)                     # (o, c, f)
    wl = jnp.transpose(wl, (2, 1, 0))                             # (f, c, o)
    wl = jnp.pad(wl, ((0, 0), (0, C - odim), (0, C - odim)))
    wl_mat = wl.reshape(F2 * C, C).astype(jnp.bfloat16)
    blp = jnp.pad(params["bl"], (0, C - odim)).reshape(1, C).astype(jnp.float32)
    pe = jnp.pad(sinusoidal_pe(T2, odim), ((0, 0), (0, C - odim)))

    def _h1_view_spec(kw):
        return pl.BlockSpec(
            (1, 2, 1, T2 + 1, C),
            lambda b, f2, _kw=kw: (b, _kw % 2, _kw // 2 + f2, 0, 0))

    ce2 = pl.CostEstimate(
        flops=2 * B * F2 * T2 * C * C * 10, transcendentals=0,
        bytes_accessed=(h1p.size * 2 * 2 + w2p.size * 2 + wl_mat.size * 2
                        + B * T2 * C * 4 + pe.size * 4))

    out_p = pl.pallas_call(
        functools.partial(_conv2_linear_pe_kernel, t2=T2, scale=scale),
        out_shape=jax.ShapeDtypeStruct((B, T2, C), jnp.float32),
        grid_spec=pltpu.PrefetchScalarGridSpec(
            num_scalar_prefetch=0,
            grid=(B, F2),
            in_specs=[
                _h1_view_spec(0), _h1_view_spec(1), _h1_view_spec(2),
                pl.BlockSpec((9, C, C), lambda b, f2: (0, 0, 0)),
                pl.BlockSpec((1, C), lambda b, f2: (0, 0)),
                pl.BlockSpec((C, C), lambda b, f2: (f2, 0)),
                pl.BlockSpec((1, C), lambda b, f2: (0, 0)),
                pl.BlockSpec((T2, C), lambda b, f2: (0, 0)),
            ],
            out_specs=pl.BlockSpec((1, T2, C), lambda b, f2: (b, 0, 0)),
        ),
        compiler_params=pltpu.CompilerParams(
            dimension_semantics=("parallel", "arbitrary"),
            vmem_limit_bytes=_VMEM_LIMIT),
        cost_estimate=ce2,
    )(h1p, h1p, h1p, w2p, b2p, wl_mat, blp, pe)

    out = out_p[:, :, :odim] if C != odim else out_p

    mask_out = None
    if x_mask is not None:
        mask_out = x_mask[:, :, :-2:2][:, :, :-2:2]
    return out, mask_out


def reference_forward(params, x, x_mask):
    """Plain-JAX mirror of the PyTorch module (bf16 matmul operands, f32 acc)."""
    odim = params["w1"].shape[0]
    dn = ("NCHW", "OIHW", "NCHW")
    h = x.astype(jnp.bfloat16)[:, None, :, :]
    h = jax.lax.conv_general_dilated(
        h, params["w1"].astype(jnp.bfloat16), (2, 2), "VALID",
        dimension_numbers=dn, preferred_element_type=jnp.float32)
    h = jnp.maximum(h + params["b1"][None, :, None, None], 0.0).astype(jnp.bfloat16)
    h = jax.lax.conv_general_dilated(
        h, params["w2"].astype(jnp.bfloat16), (2, 2), "VALID",
        dimension_numbers=dn, preferred_element_type=jnp.float32)
    h = jnp.maximum(h + params["b2"][None, :, None, None], 0.0)
    b, c, t, f = h.shape
    flat = jnp.transpose(h, (0, 2, 1, 3)).reshape(b, t, c * f).astype(jnp.bfloat16)
    y = jnp.dot(flat, params["wl"].T.astype(jnp.bfloat16),
                preferred_element_type=jnp.float32) + params["bl"]
    y = y * math.sqrt(odim) + sinusoidal_pe(t, odim)[None]
    mask = None if x_mask is None else x_mask[:, :, :-2:2][:, :, :-2:2]
    return y, mask


# ----------------------------------- main ------------------------------------

if __name__ == "__main__":
    B, T, idim, odim = 2, 16, 16, 32
    key = jax.random.PRNGKey(0)
    kx, kp = jax.random.split(key)

    x = jax.random.normal(kx, (B, T, idim), jnp.float32)
    x_mask = jnp.ones((B, 1, T), dtype=jnp.bool_)
    params = init_params(kp, idim, odim)

    fwd = jax.jit(conv2d_subsampling_forward)
    out, mask_out = fwd(params, x, x_mask)
    out = jax.block_until_ready(out)
    mask_out = jax.block_until_ready(mask_out)

    T2 = ((T - 1) // 2 - 1) // 2
    assert out.shape == (B, T2, odim), out.shape
    assert mask_out.shape == (B, 1, T2), mask_out.shape
    assert out.dtype == jnp.float32

    ref_out, ref_mask = reference_forward(params, x, x_mask)
    max_err = float(jnp.max(jnp.abs(out - ref_out)))
    assert max_err < 5e-3, f"max abs error vs reference: {max_err}"
    assert bool(jnp.all(mask_out == ref_mask))
    print("KERNEL_OK")
</pallas_src>

<mosaic_0001>
module attributes {stable_mosaic.version = 11 : i64} {
  func.func @_conv1_kernel(%arg0: i32, %arg1: i32, %arg2: memref<1x1x16x9xbf16, #tpu.memory_space<vmem>>, %arg3: memref<9x128xbf16, #tpu.memory_space<vmem>>, %arg4: memref<1x128xf32, #tpu.memory_space<vmem>>, %arg5: memref<1x1x16x128xbf16, #tpu.memory_space<vmem>>) attributes {dimension_semantics = [#tpu.dimension_semantics<parallel>, #tpu.dimension_semantics<parallel>], iteration_bounds = array<i64: 2, 4>, scalar_prefetch = 0 : i64, scratch_operands = 0 : i64, tpu.core_type = #tpu.core_type<tc>, window_params = [{transform_indices = @transform_0, window_bounds = array<i64: 1, 1, 16, 9>}, {pipeline_mode = #tpu.pipeline_mode<synchronous>, transform_indices = @transform_1, window_bounds = array<i64: 9, 128>}, {pipeline_mode = #tpu.pipeline_mode<synchronous>, transform_indices = @transform_2, window_bounds = array<i64: 1, 128>}, {transform_indices = @transform_3, window_bounds = array<i64: 1, 1, 16, 128>}]} {
    %c0 = arith.constant 0 : index
    %c0_0 = arith.constant 0 : index
    %c0_1 = arith.constant 0 : index
    %c0_2 = arith.constant 0 : index
    %0 = vector.load %arg2[%c0, %c0_0, %c0_1, %c0_2] : memref<1x1x16x9xbf16, #tpu.memory_space<vmem>>, vector<1x1x16x9xbf16>
    %1 = vector.shape_cast %0 : vector<1x1x16x9xbf16> to vector<16x9xbf16>
    %c0_3 = arith.constant 0 : index
    %c0_4 = arith.constant 0 : index
    %2 = vector.load %arg3[%c0_3, %c0_4] : memref<9x128xbf16, #tpu.memory_space<vmem>>, vector<9x128xbf16>
    %cst = arith.constant dense<0.000000e+00> : vector<16x128xf32>
    %3 = tpu.matmul %1, %2, %cst {dimension_numbers = #tpu.dot_dimension_numbers<[1], [0], [0], [1], [0, 0, 1, 1], [], []>} : vector<16x9xbf16>, vector<9x128xbf16>, vector<16x128xf32> -> vector<16x128xf32>
    %c0_5 = arith.constant 0 : index
    %c0_6 = arith.constant 0 : index
    %4 = vector.load %arg4[%c0_5, %c0_6] : memref<1x128xf32, #tpu.memory_space<vmem>>, vector<1x128xf32>
    %5 = vector.broadcast %4 : vector<1x128xf32> to vector<16x128xf32>
    %6 = arith.addf %3, %5 : vector<16x128xf32>
    %cst_7 = arith.constant 0.000000e+00 : f32
    %7 = vector.broadcast %cst_7 : f32 to vector<16x128xf32>
    %8 = arith.maximumf %6, %7 : vector<16x128xf32>
    %9 = arith.truncf %8 : vector<16x128xf32> to vector<16x128xbf16>
    %c0_8 = arith.constant 0 : index
    %c0_9 = arith.constant 0 : index
    %c0_10 = arith.constant 0 : index
    %c0_11 = arith.constant 0 : index
    %10 = vector.load %arg5[%c0_8, %c0_9, %c0_10, %c0_11] : memref<1x1x16x128xbf16, #tpu.memory_space<vmem>>, vector<1x1x16x128xbf16>
    %11 = vector.shape_cast %10 : vector<1x1x16x128xbf16> to vector<16x128xbf16>
    %12 = vector.shape_cast %9 : vector<16x128xbf16> to vector<1x1x16x128xbf16>
    tpu.vector_store %arg5[%c0_8, %c0_9, %c0_10, %c0_11], %12 {strides = array<i32>} : memref<1x1x16x128xbf16, #tpu.memory_space<vmem>>, vector<1x1x16x128xbf16>,
    return
  }
  func.func @transform_0(%arg0: i32, %arg1: i32) -> (i32, i32, i32, i32) {
    %c0_i32 = arith.constant 0 : i32
    %c0_i32_0 = arith.constant 0 : i32
    %c0_i32_1 = arith.constant 0 : i32
    return %arg0, %arg1, %c0_i32, %c0_i32_0 : i32, i32, i32, i32
  }
  func.func @transform_1(%arg0: i32, %arg1: i32) -> (i32, i32) {
    %c0_i32 = arith.constant 0 : i32
    %c0_i32_0 = arith.constant 0 : i32
    %c0_i32_1 = arith.constant 0 : i32
    return %c0_i32, %c0_i32_0 : i32, i32
  }
  func.func @transform_2(%arg0: i32, %arg1: i32) -> (i32, i32) {
    %c0_i32 = arith.constant 0 : i32
    %c0_i32_0 = arith.constant 0 : i32
    %c0_i32_1 = arith.constant 0 : i32
    return %c0_i32, %c0_i32_0 : i32, i32
  }
  func.func @transform_3(%arg0: i32, %arg1: i32) -> (i32, i32, i32, i32) {
    %c0_i32 = arith.constant 0 : i32
    %c0_i32_0 = arith.constant 0 : i32
    %c0_i32_1 = arith.constant 0 : i32
    return %arg0, %arg1, %c0_i32, %c0_i32_0 : i32, i32, i32, i32
  }
}

module attributes {stable_mosaic.version = 11 : i64} {
  func.func @_conv2_linear_pe_kernel(%arg0: i32, %arg1: i32, %arg2: memref<1x2x1x4x128xbf16, #tpu.memory_space<vmem>>, %arg3: memref<1x2x1x4x128xbf16, #tpu.memory_space<vmem>>, %arg4: memref<1x2x1x4x128xbf16, #tpu.memory_space<vmem>>, %arg5: memref<9x128x128xbf16, #tpu.memory_space<vmem>>, %arg6: memref<1x128xf32, #tpu.memory_space<vmem>>, %arg7: memref<128x128xbf16, #tpu.memory_space<vmem>>, %arg8: memref<1x128xf32, #tpu.memory_space<vmem>>, %arg9: memref<3x128xf32, #tpu.memory_space<vmem>>, %arg10: memref<1x3x128xf32, #tpu.memory_space<vmem>>) attributes {dimension_semantics = [#tpu.dimension_semantics<parallel>, #tpu.dimension_semantics<arbitrary>], iteration_bounds = array<i64: 2, 3>, scalar_prefetch = 0 : i64, scratch_operands = 0 : i64, tpu.core_type = #tpu.core_type<tc>, window_params = [{transform_indices = @transform_0, window_bounds = array<i64: 1, 2, 1, 4, 128>}, {transform_indices = @transform_1, window_bounds = array<i64: 1, 2, 1, 4, 128>}, {transform_indices = @transform_2, window_bounds = array<i64: 1, 2, 1, 4, 128>}, {pipeline_mode = #tpu.pipeline_mode<synchronous>, transform_indices = @transform_3, window_bounds = array<i64: 9, 128, 128>}, {pipeline_mode = #tpu.pipeline_mode<synchronous>, transform_indices = @transform_4, window_bounds = array<i64: 1, 128>}, {transform_indices = @transform_5, window_bounds = array<i64: 128, 128>}, {pipeline_mode = #tpu.pipeline_mode<synchronous>, transform_indices = @transform_6, window_bounds = array<i64: 1, 128>}, {pipeline_mode = #tpu.pipeline_mode<synchronous>, transform_indices = @transform_7, window_bounds = array<i64: 3, 128>}, {transform_indices = @transform_8, window_bounds = array<i64: 1, 3, 128>}]} {
    %cst = arith.constant 0.000000e+00 : f32
    %0 = vector.broadcast %cst : f32 to vector<3x128xf32>
    %c0 = arith.constant 0 : index
    %c0_0 = arith.constant 0 : index
    %1 = vector.load %arg6[%c0, %c0_0] : memref<1x128xf32, #tpu.memory_space<vmem>>, vector<1x128xf32>
    %2 = vector.broadcast %1 : vector<1x128xf32> to vector<3x128xf32>
    %3 = arith.addf %0, %2 : vector<3x128xf32>
    %c0_1 = arith.constant 0 : index
    %c0_2 = arith.constant 0 : index
    %c0_3 = arith.constant 0 : index
    %c0_4 = arith.constant 0 : index
    %c0_5 = arith.constant 0 : index
    %4 = vector.load %arg2[%c0_1, %c0_2, %c0_3, %c0_4, %c0_5] : memref<1x2x1x4x128xbf16, #tpu.memory_space<vmem>>, vector<1x1x1x3x128xbf16>
    %5 = vector.shape_cast %4 : vector<1x1x1x3x128xbf16> to vector<3x128xbf16>
    %c0_6 = arith.constant 0 : index
    %c0_7 = arith.constant 0 : index
    %c0_8 = arith.constant 0 : index
    %6 = vector.load %arg5[%c0_6, %c0_7, %c0_8] : memref<9x128x128xbf16, #tpu.memory_space<vmem>>, vector<1x128x128xbf16>
    %7 = vector.shape_cast %6 : vector<1x128x128xbf16> to vector<128x128xbf16>
    %cst_9 = arith.constant dense<0.000000e+00> : vector<3x128xf32>
    %8 = tpu.matmul %5, %7, %cst_9 {dimension_numbers = #tpu.dot_dimension_numbers<[1], [0], [0], [1], [0, 0, 1, 1], [], []>} : vector<3x128xbf16>, vector<128x128xbf16>, vector<3x128xf32> -> vector<3x128xf32>
    %9 = arith.addf %3, %8 : vector<3x128xf32>
    %c0_10 = arith.constant 0 : index
    %c1 = arith.constant 1 : index
    %c0_11 = arith.constant 0 : index
    %c0_12 = arith.constant 0 : index
    %c0_13 = arith.constant 0 : index
    %10 = vector.load %arg2[%c0_10, %c1, %c0_11, %c0_12, %c0_13] : memref<1x2x1x4x128xbf16, #tpu.memory_space<vmem>>, vector<1x1x1x3x128xbf16>
    %11 = vector.shape_cast %10 : vector<1x1x1x3x128xbf16> to vector<3x128xbf16>
    %c3 = arith.constant 3 : index
    %c0_14 = arith.constant 0 : index
    %c0_15 = arith.constant 0 : index
    %12 = vector.load %arg5[%c3, %c0_14, %c0_15] : memref<9x128x128xbf16, #tpu.memory_space<vmem>>, vector<1x128x128xbf16>
    %13 = vector.shape_cast %12 : vector<1x128x128xbf16> to vector<128x128xbf16>
    %cst_16 = arith.constant dense<0.000000e+00> : vector<3x128xf32>
    %14 = tpu.matmul %11, %13, %cst_16 {dimension_numbers = #tpu.dot_dimension_numbers<[1], [0], [0], [1], [0, 0, 1, 1], [], []>} : vector<3x128xbf16>, vector<128x128xbf16>, vector<3x128xf32> -> vector<3x128xf32>
    %15 = arith.addf %9, %14 : vector<3x128xf32>
    %c0_17 = arith.constant 0 : index
    %c0_18 = arith.constant 0 : index
    %c0_19 = arith.constant 0 : index
    %c1_20 = arith.constant 1 : index
    %c0_21 = arith.constant 0 : index
    %16 = vector.load %arg2[%c0_17, %c0_18, %c0_19, %c1_20, %c0_21] : memref<1x2x1x4x128xbf16, #tpu.memory_space<vmem>>, vector<1x1x1x3x128xbf16>
    %17 = vector.shape_cast %16 : vector<1x1x1x3x128xbf16> to vector<3x128xbf16>
    %c6 = arith.constant 6 : index
    %c0_22 = arith.constant 0 : index
    %c0_23 = arith.constant 0 : index
    %18 = vector.load %arg5[%c6, %c0_22, %c0_23] : memref<9x128x128xbf16, #tpu.memory_space<vmem>>, vector<1x128x128xbf16>
    %19 = vector.shape_cast %18 : vector<1x128x128xbf16> to vector<128x128xbf16>
    %cst_24 = arith.constant dense<0.000000e+00> : vector<3x128xf32>
    %20 = tpu.matmul %17, %19, %cst_24 {dimension_numbers = #tpu.dot_dimension_numbers<[1], [0], [0], [1], [0, 0, 1, 1], [], []>} : vector<3x128xbf16>, vector<128x128xbf16>, vector<3x128xf32> -> vector<3x128xf32>
    %21 = arith.addf %15, %20 : vector<3x128xf32>
    %c0_25 = arith.constant 0 : index
    %c0_26 = arith.constant 0 : index
    %c0_27 = arith.constant 0 : index
    %c0_28 = arith.constant 0 : index
    %c0_29 = arith.constant 0 : index
    %22 = vector.load %arg3[%c0_25, %c0_26, %c0_27, %c0_28, %c0_29] : memref<1x2x1x4x128xbf16, #tpu.memory_space<vmem>>, vector<1x1x1x3x128xbf16>
    %23 = vector.shape_cast %22 : vector<1x1x1x3x128xbf16> to vector<3x128xbf16>
    %c1_30 = arith.constant 1 : index
    %c0_31 = arith.constant 0 : index
    %c0_32 = arith.constant 0 : index
    %24 = vector.load %arg5[%c1_30, %c0_31, %c0_32] : memref<9x128x128xbf16, #tpu.memory_space<vmem>>, vector<1x128x128xbf16>
    %25 = vector.shape_cast %24 : vector<1x128x128xbf16> to vector<128x128xbf16>
    %cst_33 = arith.constant dense<0.000000e+00> : vector<3x128xf32>
    %26 = tpu.matmul %23, %25, %cst_33 {dimension_numbers = #tpu.dot_dimension_numbers<[1], [0], [0], [1], [0, 0, 1, 1], [], []>} : vector<3x128xbf16>, vector<128x128xbf16>, vector<3x128xf32> -> vector<3x128xf32>
    %27 = arith.addf %21, %26 : vector<3x128xf32>
    %c0_34 = arith.constant 0 : index
    %c1_35 = arith.constant 1 : index
    %c0_36 = arith.constant 0 : index
    %c0_37 = arith.constant 0 : index
    %c0_38 = arith.constant 0 : index
    %28 = vector.load %arg3[%c0_34, %c1_35, %c0_36, %c0_37, %c0_38] : memref<1x2x1x4x128xbf16, #tpu.memory_space<vmem>>, vector<1x1x1x3x128xbf16>
    %29 = vector.shape_cast %28 : vector<1x1x1x3x128xbf16> to vector<3x128xbf16>
    %c4 = arith.constant 4 : index
    %c0_39 = arith.constant 0 : index
    %c0_40 = arith.constant 0 : index
    %30 = vector.load %arg5[%c4, %c0_39, %c0_40] : memref<9x128x128xbf16, #tpu.memory_space<vmem>>, vector<1x128x128xbf16>
    %31 = vector.shape_cast %30 : vector<1x128x128xbf16> to vector<128x128xbf16>
    %cst_41 = arith.constant dense<0.000000e+00> : vector<3x128xf32>
    %32 = tpu.matmul %29, %31, %cst_41 {dimension_numbers = #tpu.dot_dimension_numbers<[1], [0], [0], [1], [0, 0, 1, 1], [], []>} : vector<3x128xbf16>, vector<128x128xbf16>, vector<3x128xf32> -> vector<3x128xf32>
    %33 = arith.addf %27, %32 : vector<3x128xf32>
    %c0_42 = arith.constant 0 : index
    %c0_43 = arith.constant 0 : index
    %c0_44 = arith.constant 0 : index
    %c1_45 = arith.constant 1 : index
    %c0_46 = arith.constant 0 : index
    %34 = vector.load %arg3[%c0_42, %c0_43, %c0_44, %c1_45, %c0_46] : memref<1x2x1x4x128xbf16, #tpu.memory_space<vmem>>, vector<1x1x1x3x128xbf16>
    %35 = vector.shape_cast %34 : vector<1x1x1x3x128xbf16> to vector<3x128xbf16>
    %c7 = arith.constant 7 : index
    %c0_47 = arith.constant 0 : index
    %c0_48 = arith.constant 0 : index
    %36 = vector.load %arg5[%c7, %c0_47, %c0_48] : memref<9x128x128xbf16, #tpu.memory_space<vmem>>, vector<1x128x128xbf16>
    %37 = vector.shape_cast %36 : vector<1x128x128xbf16> to vector<128x128xbf16>
    %cst_49 = arith.constant dense<0.000000e+00> : vector<3x128xf32>
    %38 = tpu.matmul %35, %37, %cst_49 {dimension_numbers = #tpu.dot_dimension_numbers<[1], [0], [0], [1], [0, 0, 1, 1], [], []>} : vector<3x128xbf16>, vector<128x128xbf16>, vector<3x128xf32> -> vector<3x128xf32>
    %39 = arith.addf %33, %38 : vector<3x128xf32>
    %c0_50 = arith.constant 0 : index
    %c0_51 = arith.constant 0 : index
    %c0_52 = arith.constant 0 : index
    %c0_53 = arith.constant 0 : index
    %c0_54 = arith.constant 0 : index
    %40 = vector.load %arg4[%c0_50, %c0_51, %c0_52, %c0_53, %c0_54] : memref<1x2x1x4x128xbf16, #tpu.memory_space<vmem>>, vector<1x1x1x3x128xbf16>
    %41 = vector.shape_cast %40 : vector<1x1x1x3x128xbf16> to vector<3x128xbf16>
    %c2 = arith.constant 2 : index
    %c0_55 = arith.constant 0 : index
    %c0_56 = arith.constant 0 : index
    %42 = vector.load %arg5[%c2, %c0_55, %c0_56] : memref<9x128x128xbf16, #tpu.memory_space<vmem>>, vector<1x128x128xbf16>
    %43 = vector.shape_cast %42 : vector<1x128x128xbf16> to vector<128x128xbf16>
    %cst_57 = arith.constant dense<0.000000e+00> : vector<3x128xf32>
    %44 = tpu.matmul %41, %43, %cst_57 {dimension_numbers = #tpu.dot_dimension_numbers<[1], [0], [0], [1], [0, 0, 1, 1], [], []>} : vector<3x128xbf16>, vector<128x128xbf16>, vector<3x128xf32> -> vector<3x128xf32>
    %45 = arith.addf %39, %44 : vector<3x128xf32>
    %c0_58 = arith.constant 0 : index
    %c1_59 = arith.constant 1 : index
    %c0_60 = arith.constant 0 : index
    %c0_61 = arith.constant 0 : index
    %c0_62 = arith.constant 0 : index
    %46 = vector.load %arg4[%c0_58, %c1_59, %c0_60, %c0_61, %c0_62] : memref<1x2x1x4x128xbf16, #tpu.memory_space<vmem>>, vector<1x1x1x3x128xbf16>
    %47 = vector.shape_cast %46 : vector<1x1x1x3x128xbf16> to vector<3x128xbf16>
    %c5 = arith.constant 5 : index
    %c0_63 = arith.constant 0 : index
    %c0_64 = arith.constant 0 : index
    %48 = vector.load %arg5[%c5, %c0_63, %c0_64] : memref<9x128x128xbf16, #tpu.memory_space<vmem>>, vector<1x128x128xbf16>
    %49 = vector.shape_cast %48 : vector<1x128x128xbf16> to vector<128x128xbf16>
    %cst_65 = arith.constant dense<0.000000e+00> : vector<3x128xf32>
    %50 = tpu.matmul %47, %49, %cst_65 {dimension_numbers = #tpu.dot_dimension_numbers<[1], [0], [0], [1], [0, 0, 1, 1], [], []>} : vector<3x128xbf16>, vector<128x128xbf16>, vector<3x128xf32> -> vector<3x128xf32>
    %51 = arith.addf %45, %50 : vector<3x128xf32>
    %c0_66 = arith.constant 0 : index
    %c0_67 = arith.constant 0 : index
    %c0_68 = arith.constant 0 : index
    %c1_69 = arith.constant 1 : index
    %c0_70 = arith.constant 0 : index
    %52 = vector.load %arg4[%c0_66, %c0_67, %c0_68, %c1_69, %c0_70] : memref<1x2x1x4x128xbf16, #tpu.memory_space<vmem>>, vector<1x1x1x3x128xbf16>
    %53 = vector.shape_cast %52 : vector<1x1x1x3x128xbf16> to vector<3x128xbf16>
    %c8 = arith.constant 8 : index
    %c0_71 = arith.constant 0 : index
    %c0_72 = arith.constant 0 : index
    %54 = vector.load %arg5[%c8, %c0_71, %c0_72] : memref<9x128x128xbf16, #tpu.memory_space<vmem>>, vector<1x128x128xbf16>
    %55 = vector.shape_cast %54 : vector<1x128x128xbf16> to vector<128x128xbf16>
    %cst_73 = arith.constant dense<0.000000e+00> : vector<3x128xf32>
    %56 = tpu.matmul %53, %55, %cst_73 {dimension_numbers = #tpu.dot_dimension_numbers<[1], [0], [0], [1], [0, 0, 1, 1], [], []>} : vector<3x128xbf16>, vector<128x128xbf16>, vector<3x128xf32> -> vector<3x128xf32>
    %57 = arith.addf %51, %56 : vector<3x128xf32>
    %cst_74 = arith.constant 0.000000e+00 : f32
    %58 = vector.broadcast %cst_74 : f32 to vector<3x128xf32>
    %59 = arith.maximumf %57, %58 : vector<3x128xf32>
    %60 = arith.truncf %59 : vector<3x128xf32> to vector<3x128xbf16>
    %c0_75 = arith.constant 0 : index
    %c0_76 = arith.constant 0 : index
    %61 = vector.load %arg7[%c0_75, %c0_76] : memref<128x128xbf16, #tpu.memory_space<vmem>>, vector<128x128xbf16>
    %cst_77 = arith.constant dense<0.000000e+00> : vector<3x128xf32>
    %62 = tpu.matmul %60, %61, %cst_77 {dimension_numbers = #tpu.dot_dimension_numbers<[1], [0], [0], [1], [0, 0, 1, 1], [], []>} : vector<3x128xbf16>, vector<128x128xbf16>, vector<3x128xf32> -> vector<3x128xf32>
    %c0_i32 = arith.constant 0 : i32
    %63 = arith.cmpi eq, %arg1, %c0_i32 : i32
    %64 = arith.extui %63 : i1 to i32
    %c0_i32_78 = arith.constant 0 : i32
    %65 = arith.cmpi ne, %64, %c0_i32_78 : i32
    scf.if %65 {
      %c0_82 = arith.constant 0 : index
      %c0_83 = arith.constant 0 : index
      %c0_84 = arith.constant 0 : index
      %72 = vector.load %arg10[%c0_82, %c0_83, %c0_84] : memref<1x3x128xf32, #tpu.memory_space<vmem>>, vector<1x3x128xf32>
      %73 = vector.shape_cast %72 : vector<1x3x128xf32> to vector<3x128xf32>
      %74 = vector.shape_cast %62 : vector<3x128xf32> to vector<1x3x128xf32>
      tpu.vector_store %arg10[%c0_82, %c0_83, %c0_84], %74 {strides = array<i32>} : memref<1x3x128xf32, #tpu.memory_space<vmem>>, vector<1x3x128xf32>,
    } else {
    }
    %c0_i32_79 = arith.constant 0 : i32
    %66 = arith.cmpi sgt, %arg1, %c0_i32_79 : i32
    %67 = arith.extui %66 : i1 to i32
    %c0_i32_80 = arith.constant 0 : i32
    %68 = arith.cmpi ne, %67, %c0_i32_80 : i32
    scf.if %68 {
      %c0_82 = arith.constant 0 : index
      %c0_83 = arith.constant 0 : index
      %c0_84 = arith.constant 0 : index
      %72 = vector.load %arg10[%c0_82, %c0_83, %c0_84] : memref<1x3x128xf32, #tpu.memory_space<vmem>>, vector<1x3x128xf32>
      %73 = vector.shape_cast %72 : vector<1x3x128xf32> to vector<3x128xf32>
      %74 = arith.addf %73, %62 : vector<3x128xf32>
      %c0_85 = arith.constant 0 : index
      %c0_86 = arith.constant 0 : index
      %c0_87 = arith.constant 0 : index
      %75 = vector.load %arg10[%c0_85, %c0_86, %c0_87] : memref<1x3x128xf32, #tpu.memory_space<vmem>>, vector<1x3x128xf32>
      %76 = vector.shape_cast %75 : vector<1x3x128xf32> to vector<3x128xf32>
      %77 = vector.shape_cast %74 : vector<3x128xf32> to vector<1x3x128xf32>
      tpu.vector_store %arg10[%c0_85, %c0_86, %c0_87], %77 {strides = array<i32>} : memref<1x3x128xf32, #tpu.memory_space<vmem>>, vector<1x3x128xf32>,
    } else {
    }
    %c2_i32 = arith.constant 2 : i32
    %69 = arith.cmpi eq, %arg1, %c2_i32 : i32
    %70 = arith.extui %69 : i1 to i32
    %c0_i32_81 = arith.constant 0 : i32
    %71 = arith.cmpi ne, %70, %c0_i32_81 : i32
    scf.if %71 {
      %c0_82 = arith.constant 0 : index
      %c0_83 = arith.constant 0 : index
      %c0_84 = arith.constant 0 : index
      %72 = vector.load %arg10[%c0_82, %c0_83, %c0_84] : memref<1x3x128xf32, #tpu.memory_space<vmem>>, vector<1x3x128xf32>
      %73 = vector.shape_cast %72 : vector<1x3x128xf32> to vector<3x128xf32>
      %c0_85 = arith.constant 0 : index
      %c0_86 = arith.constant 0 : index
      %74 = vector.load %arg8[%c0_85, %c0_86] : memref<1x128xf32, #tpu.memory_space<vmem>>, vector<1x128xf32>
      %75 = vector.broadcast %74 : vector<1x128xf32> to vector<3x128xf32>
      %76 = arith.addf %73, %75 : vector<3x128xf32>
      %cst_87 = arith.constant 5.65685415 : f32
      %77 = vector.broadcast %cst_87 : f32 to vector<3x128xf32>
      %78 = arith.mulf %76, %77 : vector<3x128xf32>
      %c0_88 = arith.constant 0 : index
      %c0_89 = arith.constant 0 : index
      %79 = vector.load %arg9[%c0_88, %c0_89] : memref<3x128xf32, #tpu.memory_space<vmem>>, vector<3x128xf32>
      %80 = arith.addf %78, %79 : vector<3x128xf32>
      %c0_90 = arith.constant 0 : index
      %c0_91 = arith.constant 0 : index
      %c0_92 = arith.constant 0 : index
      %81 = vector.load %arg10[%c0_90, %c0_91, %c0_92] : memref<1x3x128xf32, #tpu.memory_space<vmem>>, vector<1x3x128xf32>
      %82 = vector.shape_cast %81 : vector<1x3x128xf32> to vector<3x128xf32>
      %83 = vector.shape_cast %80 : vector<3x128xf32> to vector<1x3x128xf32>
      tpu.vector_store %arg10[%c0_90, %c0_91, %c0_92], %83 {strides = array<i32>} : memref<1x3x128xf32, #tpu.memory_space<vmem>>, vector<1x3x128xf32>,
    } else {
    }
    return
  }
  func.func @transform_0(%arg0: i32, %arg1: i32) -> (i32, i32, i32, i32, i32) {
    %c0_i32 = arith.constant 0 : i32
    %0 = arith.addi %c0_i32, %arg1 : i32
    %c0_i32_0 = arith.constant 0 : i32
    %c0_i32_1 = arith.constant 0 : i32
    %c0_i32_2 = arith.constant 0 : i32
    %c0_i32_3 = arith.constant 0 : i32
    return %arg0, %c0_i32_0, %0, %c0_i32_1, %c0_i32_2 : i32, i32, i32, i32, i32
  }
  func.func @transform_1(%arg0: i32, %arg1: i32) -> (i32, i32, i32, i32, i32) {
    %c0_i32 = arith.constant 0 : i32
    %0 = arith.addi %c0_i32, %arg1 : i32
    %c1_i32 = arith.constant 1 : i32
    %c0_i32_0 = arith.constant 0 : i32
    %c0_i32_1 = arith.constant 0 : i32
    %c0_i32_2 = arith.constant 0 : i32
    return %arg0, %c1_i32, %0, %c0_i32_0, %c0_i32_1 : i32, i32, i32, i32, i32
  }
  func.func @transform_2(%arg0: i32, %arg1: i32) -> (i32, i32, i32, i32, i32) {
    %c1_i32 = arith.constant 1 : i32
    %0 = arith.addi %c1_i32, %arg1 : i32
    %c0_i32 = arith.constant 0 : i32
    %c0_i32_0 = arith.constant 0 : i32
    %c0_i32_1 = arith.constant 0 : i32
    %c0_i32_2 = arith.constant 0 : i32
    return %arg0, %c0_i32, %0, %c0_i32_0, %c0_i32_1 : i32, i32, i32, i32, i32
  }
  func.func @transform_3(%arg0: i32, %arg1: i32) -> (i32, i32, i32) {
    %c0_i32 = arith.constant 0 : i32
    %c0_i32_0 = arith.constant 0 : i32
    %c0_i32_1 = arith.constant 0 : i32
    %c0_i32_2 = arith.constant 0 : i32
    return %c0_i32, %c0_i32_0, %c0_i32_1 : i32, i32, i32
  }
  func.func @transform_4(%arg0: i32, %arg1: i32) -> (i32, i32) {
    %c0_i32 = arith.constant 0 : i32
    %c0_i32_0 = arith.constant 0 : i32
    %c0_i32_1 = arith.constant 0 : i32
    return %c0_i32, %c0_i32_0 : i32, i32
  }
  func.func @transform_5(%arg0: i32, %arg1: i32) -> (i32, i32) {
    %c0_i32 = arith.constant 0 : i32
    %c0_i32_0 = arith.constant 0 : i32
    return %arg1, %c0_i32 : i32, i32
  }
  func.func @transform_6(%arg0: i32, %arg1: i32) -> (i32, i32) {
    %c0_i32 = arith.constant 0 : i32
    %c0_i32_0 = arith.constant 0 : i32
    %c0_i32_1 = arith.constant 0 : i32
    return %c0_i32, %c0_i32_0 : i32, i32
  }
  func.func @transform_7(%arg0: i32, %arg1: i32) -> (i32, i32) {
    %c0_i32 = arith.constant 0 : i32
    %c0_i32_0 = arith.constant 0 : i32
    %c0_i32_1 = arith.constant 0 : i32
    return %c0_i32, %c0_i32_0 : i32, i32
  }
  func.func @transform_8(%arg0: i32, %arg1: i32) -> (i32, i32, i32) {
    %c0_i32 = arith.constant 0 : i32
    %c0_i32_0 = arith.constant 0 : i32
    %c0_i32_1 = arith.constant 0 : i32
    return %arg0, %c0_i32, %c0_i32_0 : i32, i32, i32
  }
}

</mosaic_0001>

<llo_original>
// kernel: conv2d_subsampling_forward.2
$region0: #{conv2d_subsampling_forward.2}
  #allocation0 [shape = 'u32[]', space=smem, size = 0x4, offset = 0x4, fixed_abs, tag = 'smem constant byte address 0x4 - core index']
  #allocation1 [shape = 'u32[144,128]{1,0:T(1,128)}', space=vmem, size = 0x12000, scoped, tag = 'internal scratch']
  %s0 = inlined_call_operand.hbm [shape: bf16[2,4,16,9], index: 0, kind: input, shape index: {}]
  %s1 = inlined_call_operand.hbm [shape: bf16[9,128], index: 1, kind: input, shape index: {}]
  %s2 = inlined_call_operand.hbm [shape: f32[1,128], index: 2, kind: input, shape index: {}]
  %s3 = inlined_call_operand.hbm [shape: bf16[2,4,16,128], index: 3, kind: output, shape index: {}]
  %s4 = sld [smem:[#allocation0]]
  $region57: #{conv2d_subsampling_forward.2} parent=0
    _
  %s6 = ssub.s32 1, %s4
  %s7 = scalar_select 0, %s6, %s4
  $region1: #{conv2d_subsampling_forward.2} parent=0
    #allocation2 [shape = 'u8[8192]{0}', space=vmem, size = 0x2000, scoped, tag = 'input window, operand 0']
    #allocation3 [shape = 's32[2]{0}', space=sflag, size = 0x8, scoped, tag = 'scoped memory for conv2d_subsampling_forward.2']
    #allocation4 [shape = 's32[2]{0}', space=sflag, size = 0x8, scoped, tag = 'scoped memory for conv2d_subsampling_forward.2']
    #allocation5 [shape = 'u8[4096]{0}', space=vmem, size = 0x1000, scoped, tag = 'input window, operand 1, single buffered']
    #allocation6 [shape = 's32[1]{0}', space=sflag, size = 0x4, scoped, tag = 'scoped memory for conv2d_subsampling_forward.2']
    #allocation7 [shape = 'u8[512]{0}', space=vmem, size = 0x400, scoped, tag = 'input window, operand 2, single buffered']
    #allocation8 [shape = 'u8[8192]{0}', space=vmem, size = 0x2000, scoped, tag = 'output window, operand 0']
    %8 = vsyncpa [#allocation3], 0
    %s9 = scalar_lea.sflag [#allocation3], 1
    %10 = vsyncpa %s9, 0
    %11 = vsyncpa [#allocation6], 0
    %12 = vsyncpa [#allocation4], 0
    %s13 = scalar_lea.sflag [#allocation4], 1
    %14 = vsyncpa %s13, 0
    loop: start=0, step=1, limit=10
    $region2: #{conv2d_subsampling_forward.2} parent=1 // loop_pre_header
      _
    $region3: #{conv2d_subsampling_forward.2} parent=1 // loop_header
      %s16 = sphi 0, %s20
      %p17 = scmp.ge.s32.totalorder %s16, 10
      %s23 = sphi 0, %s35
      %s24 = sphi 0, %s31
      %s25 = sphi 0, %s23
      %s26 = sphi 0, %s24
      %s27 = sphi 0, %s25
      %s28 = sphi 0, %s26
      %s40 = sphi 0, %s42
      %s43 = sphi 0, %s40
      %s44 = sphi 0, %s43
      %s60 = sphi 0, %s44
      %s64 = sphi 0, %s64
      %s66 = sphi 0, %s64
      %s67 = sphi 0, %s66
      %s81 = sphi 0, %s67
      %s85 = sphi 0, %s85
      %s87 = sphi 0, %s85
      %s88 = sphi 0, %s87
      %s102 = sphi 0, %s88
      %s110 = sphi 0, %s112
      %s113 = sphi 0, %s110
      %s114 = sphi 0, %s113
      %s130 = sphi 0, %s114
    $region4: #{conv2d_subsampling_forward.2} parent=1 // loop_header_branch
      %19 = sbr.rel (%p17) target = $region8
    $region5: #{conv2d_subsampling_forward.2} parent=1 // loop_body
      %s21 = ssub.s32 %s16, 1
      %s22 = ssub.s32 %s16, 2
      %s29 = sadd.s32 1, %s24
      %p30 = scmp.ge.s32.totalorder %s29, 4
      %s31 = scalar_select %p30, 0, %s29
      %s32 = sadd.s32 1, %s23
      %s33 = scalar_select %p30, %s32, %s23
      %p34 = scmp.ge.s32.totalorder %s33, 2
      %s35 = scalar_select %p34, 0, %s33
      %s36 = ssub.s32 %s23, %s35
      %s37 = ssub.s32 %s24, %s31
      %s38 = sor.u32 %s36, %s37
      %p39 = scmp.eq.s32.totalorder %s38, 0
      %s41 = sadd.s32 %s40, 1
      %s42 = scalar_select %p39, %s40, %s41
      %p45 = pneg %p39
      %p46 = scmp.eq.s32.totalorder %s16, 7
      %p47 = por %p45, %p46
      %p48 = scmp.ne.s32.totalorder %s40, %s43
      %p49 = scmp.eq.s32.totalorder %s16, 0
      %p50 = por %p48, %p49
      %p51 = scmp.ne.s32.totalorder %s40, %s43
      %p52 = scmp.eq.s32.totalorder %s21, 7
      %p53 = por %p51, %p52
      %p54 = scmp.ne.s32.totalorder %s43, %s44
      %p55 = scmp.eq.s32.totalorder %s21, 0
      %p56 = por %p54, %p55
      %p57 = scmp.ne.s32.totalorder %s43, %s44
      %p58 = scmp.eq.s32.totalorder %s22, 7
      %p59 = por %p57, %p58
      %p61 = scmp.ne.s32.totalorder %s44, %s60
      %p62 = scmp.eq.s32.totalorder %s22, 0
      %p63 = por %p61, %p62
      %s65 = sadd.s32 %s64, 1
      %p68 = scmp.eq.s32.totalorder %s16, 7
      %p69 = scmp.ne.s32.totalorder %s64, %s66
      %p70 = scmp.eq.s32.totalorder %s16, 0
      %p71 = por %p69, %p70
      %p72 = scmp.ne.s32.totalorder %s64, %s66
      %p73 = scmp.eq.s32.totalorder %s21, 7
      %p74 = por %p72, %p73
      %p75 = scmp.ne.s32.totalorder %s66, %s67
      %p76 = scmp.eq.s32.totalorder %s21, 0
      %p77 = por %p75, %p76
      %p78 = scmp.ne.s32.totalorder %s66, %s67
      %p79 = scmp.eq.s32.totalorder %s22, 7
      %p80 = por %p78, %p79
      %p82 = scmp.ne.s32.totalorder %s67, %s81
      %p83 = scmp.eq.s32.totalorder %s22, 0
      %p84 = por %p82, %p83
      %s86 = sadd.s32 %s85, 1
      %p89 = scmp.eq.s32.totalorder %s16, 7
      %p90 = scmp.ne.s32.totalorder %s85, %s87
      %p91 = scmp.eq.s32.totalorder %s16, 0
      %p92 = por %p90, %p91
      %p93 = scmp.ne.s32.totalorder %s85, %s87
      %p94 = scmp.eq.s32.totalorder %s21, 7
      %p95 = por %p93, %p94
      %p96 = scmp.ne.s32.totalorder %s87, %s88
      %p97 = scmp.eq.s32.totalorder %s21, 0
      %p98 = por %p96, %p97
      %p99 = scmp.ne.s32.totalorder %s87, %s88
      %p100 = scmp.eq.s32.totalorder %s22, 7
      %p101 = por %p99, %p100
      %p103 = scmp.ne.s32.totalorder %s88, %s102
      %p104 = scmp.eq.s32.totalorder %s22, 0
      %p105 = por %p103, %p104
      %s106 = ssub.s32 %s23, %s35
      %s107 = ssub.s32 %s24, %s31
      %s108 = sor.u32 %s106, %s107
      %p109 = scmp.eq.s32.totalorder %s108, 0
      %s111 = sadd.s32 %s110, 1
      %s112 = scalar_select %p109, %s110, %s111
      %p115 = pneg %p109
      %p116 = scmp.eq.s32.totalorder %s16, 7
      %p117 = por %p115, %p116
      %p118 = scmp.ne.s32.totalorder %s110, %s113
      %p119 = scmp.eq.s32.totalorder %s16, 0
      %p120 = por %p118, %p119
      %p121 = scmp.ne.s32.totalorder %s110, %s113
      %p122 = scmp.eq.s32.totalorder %s21, 7
      %p123 = por %p121, %p122
      %p124 = scmp.ne.s32.totalorder %s113, %s114
      %p125 = scmp.eq.s32.totalorder %s21, 0
      %p126 = por %p124, %p125
      %p127 = scmp.ne.s32.totalorder %s113, %s114
      %p128 = scmp.eq.s32.totalorder %s22, 7
      %p129 = por %p127, %p128
      %p131 = scmp.ne.s32.totalorder %s114, %s130
      %p132 = scmp.eq.s32.totalorder %s22, 0
      %p133 = por %p131, %p132
      %p134 = scmp.le.s32.totalorder 1, %s16
      %p135 = scmp.lt.s32.totalorder %s16, 9
      %p136 = pnand %p134, %p135
      %p137 = pneg %p136
      // Predicated region
      $region9: #{conv2d_subsampling_forward.2} parent=5 // pred_check
        _
      $region10: #{conv2d_subsampling_forward.2} parent=5 // pred_check_branch
        %139 = sbr.rel (%p136) target = $region12
      $region11: #{conv2d_subsampling_forward.2} parent=5 // pred_region
        %s140 = ssub.s32 %s16, 1
        // Predicated region
        $region13: #{conv2d_subsampling_forward.2} parent=11 // pred_check
          %p141 = pneg %p77
        $region14: #{conv2d_subsampling_forward.2} parent=11 // pred_check_branch
          %143 = sbr.rel (%p141) target = $region16
        $region15: #{conv2d_subsampling_forward.2} parent=11 // pred_region
          %s145 = ssub.s32 128, 128
          %146 = vsyncadd [#allocation6], %s145
          %s147 = sshll.u32 [#allocation5], 4
          %s148 = int_to_ptr.vmem [resolvable:$true] %s147
          %153 = dma.hbm_to_vmem [thread:$0]  %s1, 128, %s148, [#allocation6], 64, 64, 4
        $region16: #{conv2d_subsampling_forward.2} parent=11 // pred_fallthru
          _
        // Predicated region
        $region17: #{conv2d_subsampling_forward.2} parent=11 // pred_check
          %p154 = pneg %p98
        $region18: #{conv2d_subsampling_forward.2} parent=11 // pred_check_branch
          %156 = sbr.rel (%p154) target = $region20
        $region19: #{conv2d_subsampling_forward.2} parent=11 // pred_region
          %s158 = ssub.s32 16, 16
          %159 = vsyncadd [#allocation6], %s158
          %s161 = sshll.u32 [#allocation7], 4
          %s162 = int_to_ptr.vmem [resolvable:$true] %s161
          %164 = dma.hbm_to_vmem [thread:$0]  %s2, 16, %s162, [#allocation6]
        $region20: #{conv2d_subsampling_forward.2} parent=11 // pred_fallthru
          _
      $region12: #{conv2d_subsampling_forward.2} parent=5 // pred_fallthru
        _
      %p165 = scmp.lt.s32.totalorder %s16, 8
      // Predicated region
      $region21: #{conv2d_subsampling_forward.2} parent=5 // pred_check
        %p166 = pneg %p165
      $region22: #{conv2d_subsampling_forward.2} parent=5 // pred_check_branch
        %168 = sbr.rel (%p166) target = $region24
      $region23: #{conv2d_subsampling_forward.2} parent=5 // pred_region
        // Predicated region
        $region25: #{conv2d_subsampling_forward.2} parent=23 // pred_check
          %p169 = pneg %p50
        $region26: #{conv2d_subsampling_forward.2} parent=23 // pred_check_branch
          %171 = sbr.rel (%p169) target = $region28
        $region27: #{conv2d_subsampling_forward.2} parent=23 // pred_region
          %s172 = sand.u32 %s40, 1
          %s173 = scalar_lea.sflag [#allocation3], %s172
          %s174 = sand.u32 %s40, 1
          %s175 = smul.addr %s174, 8
          %s176 = scalar_lea.vmem [#allocation2], %s175
          %s178 = ssub.s32 128, 128
          %179 = vsyncadd %s173, %s178
          %s180 = smul.addr %s24, 2
          %s181 = smul.addr %s23, 8
          %s182 = sadd.s32 %s180, %s181
          %s183 = smul.addr %s182, 64
          %s184 = scalar_lea.hbm %s0, %s183
          %s185 = sshll.u32 %s176, 4
          %s186 = int_to_ptr.vmem [resolvable:$true] %s185
          %191 = dma.hbm_to_vmem [thread:$0]  %s184, 128, %s186, %s173, 64, 64, 4
        $region28: #{conv2d_subsampling_forward.2} parent=23 // pred_fallthru
          _
      $region24: #{conv2d_subsampling_forward.2} parent=5 // pred_fallthru
        _
      %p192 = scmp.le.s32.totalorder 1, %s16
      %p193 = scmp.lt.s32.totalorder %s16, 9
      %p194 = pnand %p192, %p193
      %p195 = pneg %p194
      // Predicated region
      $region29: #{conv2d_subsampling_forward.2} parent=5 // pred_check
        _
      $region30: #{conv2d_subsampling_forward.2} parent=5 // pred_check_branch
        %197 = sbr.rel (%p194) target = $region32
      $region31: #{conv2d_subsampling_forward.2} parent=5 // pred_region
        %s198 = ssub.s32 %s16, 1
        %s199 = sand.u32 %s43, 1
        %s200 = scalar_lea.sflag [#allocation3], %s199
        %s201 = sand.u32 %s43, 1
        %s202 = smul.addr %s201, 8
        %s203 = scalar_lea.vmem [#allocation2], %s202
        // Predicated region
        $region33: #{conv2d_subsampling_forward.2} parent=31 // pred_check
          %p204 = pneg %p56
        $region34: #{conv2d_subsampling_forward.2} parent=31 // pred_check_branch
          %206 = sbr.rel (%p204) target = $region36
        $region35: #{conv2d_subsampling_forward.2} parent=31 // pred_region
          %207 = dma.done %s200, 128
        $region36: #{conv2d_subsampling_forward.2} parent=31 // pred_fallthru
          _
        // Predicated region
        $region37: #{conv2d_subsampling_forward.2} parent=31 // pred_check
          %p208 = pneg %p77
        $region38: #{conv2d_subsampling_forward.2} parent=31 // pred_check_branch
          %210 = sbr.rel (%p208) target = $region40
        $region39: #{conv2d_subsampling_forward.2} parent=31 // pred_region
          %211 = dma.done [#allocation6], 128
        $region40: #{conv2d_subsampling_forward.2} parent=31 // pred_fallthru
          _
        // Predicated region
        $region41: #{conv2d_subsampling_forward.2} parent=31 // pred_check
          %p212 = pneg %p98
        $region42: #{conv2d_subsampling_forward.2} parent=31 // pred_check_branch
          %214 = sbr.rel (%p212) target = $region44
        $region43: #{conv2d_subsampling_forward.2} parent=31 // pred_region
          %215 = dma.done [#allocation6], 16
        $region44: #{conv2d_subsampling_forward.2} parent=31 // pred_fallthru
          _
        %s216 = sand.u32 %s43, 1
        %s217 = scalar_lea.sflag [#allocation3], %s216
        %s218 = sand.u32 %s43, 1
        %s219 = smul.addr %s218, 8
        %s220 = scalar_lea.vmem [#allocation2], %s219
        %p221 = pneg %p56
        %p222 = pneg %p53
        %p223 = pneg %p77
        %p224 = pneg %p74
        %p225 = pneg %p98
        %p226 = pneg %p95
        %p227 = pneg %p126
        %p228 = pneg %p123
        %s229 = sand.u32 %s113, 1
        %s230 = scalar_lea.sflag [#allocation4], %s229
        %s231 = sand.u32 %s113, 1
        %s232 = smul.addr %s231, 8
        %s233 = scalar_lea.vmem [#allocation8], %s232
        %v235 = vld [vmem:[%s203] sm:$0xf]
        %v236 = vld [vmem:[%s203 + $0x4] sm:$0xf]
        %v237 = vld [vmem:[#allocation5] sm:$0xf]
        %v238 = vld [vmem:[#allocation5 + $0x4] sm:$0x1]
        %v239 = vld [vmem:[#allocation7] sm:$0x1]
        %v241 = vlaneseq
        %v242 = vshrl.u32 %v241, 7
        %v243 = vsub.s32 0, %v242
        %v244 = vrot.slane %v239, %v243
        %v248 = vunpack.c.l.b16 %v235
        %v249 = vunpack.c.l.b16 %v236
        %v250 = vpack.c.b16 %v249, %v248
        %v253 = vunpack.c.l.b16 %v237
        %v254 = vunpack.c.l.b16 %v238
        %v255 = vpack.c.b16 %v254, %v253
        %vm256 = vcmask 72704
        %v258 = vsel %vm256, %v250, 0
        %vm260 = vcmask 1043456
        %vm261 = vcmask 1044480
        %v262 = vsel %vm260, 4294967295, 65535
        %v263 = vsel %vm261, %v262, 0
        %v265 = vand.u32 %v255, %v263
        %267 = vmatprep.subr.bf16.mxu0 0
        %268 = vmatpush1.bf16.msra.mxu0 %v265
        %269 = vmatprep.subr.bf16.mxu0 0
        %270 = vmatpush1.bf16.msra.mxu0 0
        %271 = vmatprep.subr.bf16.mxu0 0
        %272 = vmatpush1.bf16.msra.mxu0 0
        %273 = vmatprep.subr.bf16.mxu0 0
        %274 = vmatpush1.bf16.msra.mxu0 0
        %275 = vmatprep.subr.bf16.mxu0 0
        %276 = vmatpush1.bf16.msra.mxu0 0
        %277 = vmatprep.subr.bf16.mxu0 0
        %278 = vmatpush1.bf16.msra.mxu0 0
        %279 = vmatprep.subr.bf16.mxu0 0
        %280 = vmatpush1.bf16.msra.mxu0 0
        %281 = vmatprep.subr.bf16.mxu0 0
        %282 = vmatpush1.bf16.msra.mxu0 0
        %283 = vmatprep.subr.bf16.mxu0 0
        %284 = vmatpush1.bf16.msra.mxu0 0
        %285 = vmatprep.subr.bf16.mxu0 0
        %286 = vmatpush1.bf16.msra.mxu0 0
        %287 = vmatprep.subr.bf16.mxu0 0
        %288 = vmatpush1.bf16.msra.mxu0 0
        %289 = vmatprep.subr.bf16.mxu0 0
        %290 = vmatpush1.bf16.msra.mxu0 0
        %291 = vmatprep.subr.bf16.mxu0 0
        %292 = vmatpush1.bf16.msra.mxu0 0
        %293 = vmatprep.subr.bf16.mxu0 0
        %294 = vmatpush1.bf16.msra.mxu0 0
        %295 = vmatprep.subr.bf16.mxu0 0
        %296 = vmatpush1.bf16.msra.mxu0 0
        %297 = vmatprep.subr.bf16.mxu0 0
        %298 = vmatpush1.bf16.msra.mxu0 0
        %299 = vmatprep.mubr.bf16.mxu0 0
        %300 = vmatmul.mubr.bf16.gmra.mrb[0].mxu0 %v258
        %v301 = vpop.f32.mrb[0].mxu0
        %v302 = vadd.f32 %v244, %v301
        %v303 = vpop.f32.mrb[0].mxu0
        %v304 = vpop.f32.mrb[0].mxu0
        %v305 = vadd.f32 %v244, %v304
        %v306 = vpop.f32.mrb[0].mxu0
        %307 = vdwg.mxu0
        %v308 = vmax.f32 %v302, 0.0
        %v309 = vmax.f32 %v305, 0.0
        %v310 = vpack.c.bf16 %v309, %v308
        %v312 = vunpack.c.l.b16 %v310
        %v313 = vunpack.c.h.b16 %v310
        %v314 = vpack.c.b16 %v312, %v312
        %v315 = vpack.c.b16 %v313, %v313
        %318 = vst [vmem:[%s233] sm:$0xf] %v314
        %319 = vst [vmem:[%s233 + $0x4] sm:$0xf] %v315
        %s320 = sand.u32 %s113, 1
        %s321 = scalar_lea.sflag [#allocation4], %s320
        %s322 = sand.u32 %s113, 1
        %s323 = smul.addr %s322, 8
        %s324 = scalar_lea.vmem [#allocation8], %s323
        // Predicated region
        $region45: #{conv2d_subsampling_forward.2} parent=31 // pred_check
          %p325 = pneg %p123
        $region46: #{conv2d_subsampling_forward.2} parent=31 // pred_check_branch
          %327 = sbr.rel (%p325) target = $region48
        $region47: #{conv2d_subsampling_forward.2} parent=31 // pred_region
          %s329 = ssub.s32 128, 128
          %330 = vsyncadd %s321, %s329
          %s331 = smul.addr %s26, 2
          %s332 = smul.addr %s25, 8
          %s333 = sadd.s32 %s331, %s332
          %s334 = smul.addr %s333, 64
          %s335 = scalar_lea.hbm %s3, %s334
          %s336 = sshll.u32 %s324, 4
          %s337 = int_to_ptr.vmem [resolvable:$true] %s336
          %342 = dma.vmem_to_hbm [thread:$0]  %s337, 128, %s335, %s321, 64, 64, 4
        $region48: #{conv2d_subsampling_forward.2} parent=31 // pred_fallthru
          _
      $region32: #{conv2d_subsampling_forward.2} parent=5 // pred_fallthru
        _
      %p343 = scmp.le.s32.totalorder 2, %s16
      // Predicated region
      $region49: #{conv2d_subsampling_forward.2} parent=5 // pred_check
        %p344 = pneg %p343
      $region50: #{conv2d_subsampling_forward.2} parent=5 // pred_check_branch
        %346 = sbr.rel (%p344) target = $region52
      $region51: #{conv2d_subsampling_forward.2} parent=5 // pred_region
        %s347 = ssub.s32 %s16, 2
        // Predicated region
        $region53: #{conv2d_subsampling_forward.2} parent=51 // pred_check
          %p348 = pneg %p129
        $region54: #{conv2d_subsampling_forward.2} parent=51 // pred_check_branch
          %350 = sbr.rel (%p348) target = $region56
        $region55: #{conv2d_subsampling_forward.2} parent=51 // pred_region
          %s351 = sand.u32 %s114, 1
          %s352 = scalar_lea.sflag [#allocation4], %s351
          %s353 = sand.u32 %s114, 1
          %s354 = smul.addr %s353, 8
          %s355 = scalar_lea.vmem [#allocation8], %s354
          %356 = dma.done %s352, 128
        $region56: #{conv2d_subsampling_forward.2} parent=51 // pred_fallthru
          _
      $region52: #{conv2d_subsampling_forward.2} parent=5 // pred_fallthru
        _
    $region6: #{conv2d_subsampling_forward.2} parent=1 // loop_footer
      %s20 = sadd.s32 1, %s16
    $region7: #{conv2d_subsampling_forward.2} parent=1 // loop_footer_branch
      %15 = sbr.rel target = $region3
    $region8: #{conv2d_subsampling_forward.2} parent=1 // loop_exit
      _
    %357 = vsyncpa [#allocation3], 1
    %s358 = scalar_lea.sflag [#allocation3], 1
    %359 = vsyncpa %s358, 1
    %360 = vsyncpa [#allocation6], 1
    %361 = vsyncpa [#allocation4], 1
    %s362 = scalar_lea.sflag [#allocation4], 1
    %363 = vsyncpa %s362, 1

// kernel: conv2d_subsampling_forward.3
$region0: #{conv2d_subsampling_forward.3}
  #allocation0 [shape = 'u32[]', space=smem, size = 0x4, offset = 0x4, fixed_abs, tag = 'smem constant byte address 0x4 - core index']
  #allocation1 [shape = 'u32[144,128]{1,0:T(1,128)}', space=vmem, size = 0x12000, scoped, tag = 'internal scratch']
  %s0 = inlined_call_operand.hbm [shape: bf16[2,4,4,4,128], index: 0, kind: input, shape index: {}, may-alias: {0,1,2}]
  %s1 = inlined_call_operand.hbm [shape: bf16[2,4,4,4,128], index: 1, kind: input, shape index: {}, may-alias: {0,1,2}]
  %s2 = inlined_call_operand.hbm [shape: bf16[2,4,4,4,128], index: 2, kind: input, shape index: {}, may-alias: {0,1,2}]
  %s3 = inlined_call_operand.hbm [shape: bf16[9,128,128], index: 3, kind: input, shape index: {}]
  %s4 = inlined_call_operand.hbm [shape: f32[1,128], index: 4, kind: input, shape index: {}]
  %s5 = inlined_call_operand.hbm [shape: bf16[384,128], index: 5, kind: input, shape index: {}]
  %s6 = inlined_call_operand.hbm [shape: f32[1,128], index: 6, kind: input, shape index: {}]
  %s7 = inlined_call_operand.hbm [shape: f32[3,128], index: 7, kind: input, shape index: {}]
  %s8 = inlined_call_operand.hbm [shape: f32[2,3,128], index: 8, kind: output, shape index: {}]
  %s9 = sld [smem:[#allocation0]]
  $region109: #{conv2d_subsampling_forward.3} parent=0
    _
  %s11 = ssub.s32 1, %s9
  %s12 = scalar_select 0, %s11, %s9
  $region1: #{conv2d_subsampling_forward.3} parent=0
    #allocation2 [shape = 'u8[4096]{0}', space=vmem, size = 0x1000, scoped, tag = 'input window, operand 0']
    #allocation3 [shape = 's32[2]{0}', space=sflag, size = 0x8, scoped, tag = 'scoped memory for conv2d_subsampling_forward.3']
    #allocation4 [shape = 's32[2]{0}', space=sflag, size = 0x8, scoped, tag = 'scoped memory for conv2d_subsampling_forward.3']
    #allocation5 [shape = 'u8[4096]{0}', space=vmem, size = 0x1000, scoped, tag = 'input window, operand 1']
    #allocation6 [shape = 's32[2]{0}', space=sflag, size = 0x8, scoped, tag = 'scoped memory for conv2d_subsampling_forward.3']
    #allocation7 [shape = 'u8[4096]{0}', space=vmem, size = 0x1000, scoped, tag = 'input window, operand 2']
    #allocation8 [shape = 'u8[294912]{0}', space=vmem, size = 0x48000, scoped, tag = 'input window, operand 3, single buffered']
    #allocation9 [shape = 's32[1]{0}', space=sflag, size = 0x4, scoped, tag = 'scoped memory for conv2d_subsampling_forward.3']
    #allocation10 [shape = 'u8[512]{0}', space=vmem, size = 0x400, scoped, tag = 'input window, operand 4, single buffered']
    #allocation11 [shape = 'u8[65536]{0}', space=vmem, size = 0x10000, scoped, tag = 'input window, operand 5']
    #allocation12 [shape = 's32[2]{0}', space=sflag, size = 0x8, scoped, tag = 'scoped memory for conv2d_subsampling_forward.3']
    #allocation13 [shape = 'u8[512]{0}', space=vmem, size = 0x400, scoped, tag = 'input window, operand 6, single buffered']
    #allocation14 [shape = 'u8[2048]{0}', space=vmem, size = 0x800, scoped, tag = 'input window, operand 7, single buffered']
    #allocation15 [shape = 's32[1]{0}', space=sflag, size = 0x4, scoped, tag = 'scoped memory for conv2d_subsampling_forward.3']
    #allocation16 [shape = 'u8[4096]{0}', space=vmem, size = 0x1000, scoped, tag = 'output window, operand 0']
    %13 = vsyncpa [#allocation3], 0
    %s14 = scalar_lea.sflag [#allocation3], 1
    %15 = vsyncpa %s14, 0
    %16 = vsyncpa [#allocation6], 0
    %s17 = scalar_lea.sflag [#allocation6], 1
    %18 = vsyncpa %s17, 0
    %19 = vsyncpa [#allocation9], 0
    %20 = vsyncpa [#allocation12], 0
    %s21 = scalar_lea.sflag [#allocation12], 1
    %22 = vsyncpa %s21, 0
    %23 = vsyncpa [#allocation15], 0
    %24 = vsyncpa [#allocation4], 0
    %s25 = scalar_lea.sflag [#allocation4], 1
    %26 = vsyncpa %s25, 0
    loop: start=0, step=1, limit=8
    $region2: #{conv2d_subsampling_forward.3} parent=1 // loop_pre_header
      _
    $region3: #{conv2d_subsampling_forward.3} parent=1 // loop_header
      %s28 = sphi 0, %s32
      %p29 = scmp.ge.s32.totalorder %s28, 8
      %s35 = sphi 0, %s47
      %s36 = sphi 0, %s43
      %s37 = sphi 0, %s35
      %s38 = sphi 0, %s36
      %s39 = sphi 0, %s37
      %s40 = sphi 0, %s38
      %s52 = sphi 0, %s54
      %s55 = sphi 0, %s52
      %s56 = sphi 0, %s55
      %s72 = sphi 0, %s56
      %s80 = sphi 0, %s82
      %s83 = sphi 0, %s80
      %s84 = sphi 0, %s83
      %s100 = sphi 0, %s84
      %s110 = sphi 0, %s112
      %s113 = sphi 0, %s110
      %s114 = sphi 0, %s113
      %s130 = sphi 0, %s114
      %s134 = sphi 0, %s134
      %s136 = sphi 0, %s134
      %s137 = sphi 0, %s136
      %s151 = sphi 0, %s137
      %s155 = sphi 0, %s155
      %s157 = sphi 0, %s155
      %s158 = sphi 0, %s157
      %s172 = sphi 0, %s158
      %s178 = sphi 0, %s180
      %s181 = sphi 0, %s178
      %s182 = sphi 0, %s181
      %s198 = sphi 0, %s182
      %s202 = sphi 0, %s202
      %s204 = sphi 0, %s202
      %s205 = sphi 0, %s204
      %s219 = sphi 0, %s205
      %s223 = sphi 0, %s223
      %s225 = sphi 0, %s223
      %s226 = sphi 0, %s225
      %s240 = sphi 0, %s226
      %s246 = sphi 0, %s248
      %s249 = sphi 0, %s246
      %s250 = sphi 0, %s249
      %s266 = sphi 0, %s250
    $region4: #{conv2d_subsampling_forward.3} parent=1 // loop_header_branch
      %31 = sbr.rel (%p29) target = $region8
    $region5: #{conv2d_subsampling_forward.3} parent=1 // loop_body
      %s33 = ssub.s32 %s28, 1
      %s34 = ssub.s32 %s28, 2
      %s41 = sadd.s32 1, %s36
      %p42 = scmp.ge.s32.totalorder %s41, 3
      %s43 = scalar_select %p42, 0, %s41
      %s44 = sadd.s32 1, %s35
      %s45 = scalar_select %p42, %s44, %s35
      %p46 = scmp.ge.s32.totalorder %s45, 2
      %s47 = scalar_select %p46, 0, %s45
      %s48 = ssub.s32 %s35, %s47
      %s49 = ssub.s32 %s36, %s43
      %s50 = sor.u32 %s48, %s49
      %p51 = scmp.eq.s32.totalorder %s50, 0
      %s53 = sadd.s32 %s52, 1
      %s54 = scalar_select %p51, %s52, %s53
      %p57 = pneg %p51
      %p58 = scmp.eq.s32.totalorder %s28, 5
      %p59 = por %p57, %p58
      %p60 = scmp.ne.s32.totalorder %s52, %s55
      %p61 = scmp.eq.s32.totalorder %s28, 0
      %p62 = por %p60, %p61
      %p63 = scmp.ne.s32.totalorder %s52, %s55
      %p64 = scmp.eq.s32.totalorder %s33, 5
      %p65 = por %p63, %p64
      %p66 = scmp.ne.s32.totalorder %s55, %s56
      %p67 = scmp.eq.s32.totalorder %s33, 0
      %p68 = por %p66, %p67
      %p69 = scmp.ne.s32.totalorder %s55, %s56
      %p70 = scmp.eq.s32.totalorder %s34, 5
      %p71 = por %p69, %p70
      %p73 = scmp.ne.s32.totalorder %s56, %s72
      %p74 = scmp.eq.s32.totalorder %s34, 0
      %p75 = por %p73, %p74
      %s76 = ssub.s32 %s35, %s47
      %s77 = ssub.s32 %s36, %s43
      %s78 = sor.u32 %s76, %s77
      %p79 = scmp.eq.s32.totalorder %s78, 0
      %s81 = sadd.s32 %s80, 1
      %s82 = scalar_select %p79, %s80, %s81
      %p85 = pneg %p79
      %p86 = scmp.eq.s32.totalorder %s28, 5
      %p87 = por %p85, %p86
      %p88 = scmp.ne.s32.totalorder %s80, %s83
      %p89 = scmp.eq.s32.totalorder %s28, 0
      %p90 = por %p88, %p89
      %p91 = scmp.ne.s32.totalorder %s80, %s83
      %p92 = scmp.eq.s32.totalorder %s33, 5
      %p93 = por %p91, %p92
      %p94 = scmp.ne.s32.totalorder %s83, %s84
      %p95 = scmp.eq.s32.totalorder %s33, 0
      %p96 = por %p94, %p95
      %p97 = scmp.ne.s32.totalorder %s83, %s84
      %p98 = scmp.eq.s32.totalorder %s34, 5
      %p99 = por %p97, %p98
      %p101 = scmp.ne.s32.totalorder %s84, %s100
      %p102 = scmp.eq.s32.totalorder %s34, 0
      %p103 = por %p101, %p102
      %s104 = sadd.s32 %s36, 1
      %s105 = sadd.s32 %s43, 1
      %s106 = ssub.s32 %s35, %s47
      %s107 = ssub.s32 %s104, %s105
      %s108 = sor.u32 %s106, %s107
      %p109 = scmp.eq.s32.totalorder %s108, 0
      %s111 = sadd.s32 %s110, 1
      %s112 = scalar_select %p109, %s110, %s111
      %p115 = pneg %p109
      %p116 = scmp.eq.s32.totalorder %s28, 5
      %p117 = por %p115, %p116
      %p118 = scmp.ne.s32.totalorder %s110, %s113
      %p119 = scmp.eq.s32.totalorder %s28, 0
      %p120 = por %p118, %p119
      %p121 = scmp.ne.s32.totalorder %s110, %s113
      %p122 = scmp.eq.s32.totalorder %s33, 5
      %p123 = por %p121, %p122
      %p124 = scmp.ne.s32.totalorder %s113, %s114
      %p125 = scmp.eq.s32.totalorder %s33, 0
      %p126 = por %p124, %p125
      %p127 = scmp.ne.s32.totalorder %s113, %s114
      %p128 = scmp.eq.s32.totalorder %s34, 5
      %p129 = por %p127, %p128
      %p131 = scmp.ne.s32.totalorder %s114, %s130
      %p132 = scmp.eq.s32.totalorder %s34, 0
      %p133 = por %p131, %p132
      %s135 = sadd.s32 %s134, 1
      %p138 = scmp.eq.s32.totalorder %s28, 5
      %p139 = scmp.ne.s32.totalorder %s134, %s136
      %p140 = scmp.eq.s32.totalorder %s28, 0
      %p141 = por %p139, %p140
      %p142 = scmp.ne.s32.totalorder %s134, %s136
      %p143 = scmp.eq.s32.totalorder %s33, 5
      %p144 = por %p142, %p143
      %p145 = scmp.ne.s32.totalorder %s136, %s137
      %p146 = scmp.eq.s32.totalorder %s33, 0
      %p147 = por %p145, %p146
      %p148 = scmp.ne.s32.totalorder %s136, %s137
      %p149 = scmp.eq.s32.totalorder %s34, 5
      %p150 = por %p148, %p149
      %p152 = scmp.ne.s32.totalorder %s137, %s151
      %p153 = scmp.eq.s32.totalorder %s34, 0
      %p154 = por %p152, %p153
      %s156 = sadd.s32 %s155, 1
      %p159 = scmp.eq.s32.totalorder %s28, 5
      %p160 = scmp.ne.s32.totalorder %s155, %s157
      %p161 = scmp.eq.s32.totalorder %s28, 0
      %p162 = por %p160, %p161
      %p163 = scmp.ne.s32.totalorder %s155, %s157
      %p164 = scmp.eq.s32.totalorder %s33, 5
      %p165 = por %p163, %p164
      %p166 = scmp.ne.s32.totalorder %s157, %s158
      %p167 = scmp.eq.s32.totalorder %s33, 0
      %p168 = por %p166, %p167
      %p169 = scmp.ne.s32.totalorder %s157, %s158
      %p170 = scmp.eq.s32.totalorder %s34, 5
      %p171 = por %p169, %p170
      %p173 = scmp.ne.s32.totalorder %s158, %s172
      %p174 = scmp.eq.s32.totalorder %s34, 0
      %p175 = por %p173, %p174
      %s176 = ssub.s32 %s36, %s43
      %p177 = scmp.eq.s32.totalorder %s176, 0
      %s179 = sadd.s32 %s178, 1
      %s180 = scalar_select %p177, %s178, %s179
      %p183 = pneg %p177
      %p184 = scmp.eq.s32.totalorder %s28, 5
      %p185 = por %p183, %p184
      %p186 = scmp.ne.s32.totalorder %s178, %s181
      %p187 = scmp.eq.s32.totalorder %s28, 0
      %p188 = por %p186, %p187
      %p189 = scmp.ne.s32.totalorder %s178, %s181
      %p190 = scmp.eq.s32.totalorder %s33, 5
      %p191 = por %p189, %p190
      %p192 = scmp.ne.s32.totalorder %s181, %s182
      %p193 = scmp.eq.s32.totalorder %s33, 0
      %p194 = por %p192, %p193
      %p195 = scmp.ne.s32.totalorder %s181, %s182
      %p196 = scmp.eq.s32.totalorder %s34, 5
      %p197 = por %p195, %p196
      %p199 = scmp.ne.s32.totalorder %s182, %s198
      %p200 = scmp.eq.s32.totalorder %s34, 0
      %p201 = por %p199, %p200
      %s203 = sadd.s32 %s202, 1
      %p206 = scmp.eq.s32.totalorder %s28, 5
      %p207 = scmp.ne.s32.totalorder %s202, %s204
      %p208 = scmp.eq.s32.totalorder %s28, 0
      %p209 = por %p207, %p208
      %p210 = scmp.ne.s32.totalorder %s202, %s204
      %p211 = scmp.eq.s32.totalorder %s33, 5
      %p212 = por %p210, %p211
      %p213 = scmp.ne.s32.totalorder %s204, %s205
      %p214 = scmp.eq.s32.totalorder %s33, 0
      %p215 = por %p213, %p214
      %p216 = scmp.ne.s32.totalorder %s204, %s205
      %p217 = scmp.eq.s32.totalorder %s34, 5
      %p218 = por %p216, %p217
      %p220 = scmp.ne.s32.totalorder %s205, %s219
      %p221 = scmp.eq.s32.totalorder %s34, 0
      %p222 = por %p220, %p221
      %s224 = sadd.s32 %s223, 1
      %p227 = scmp.eq.s32.totalorder %s28, 5
      %p228 = scmp.ne.s32.totalorder %s223, %s225
      %p229 = scmp.eq.s32.totalorder %s28, 0
      %p230 = por %p228, %p229
      %p231 = scmp.ne.s32.totalorder %s223, %s225
      %p232 = scmp.eq.s32.totalorder %s33, 5
      %p233 = por %p231, %p232
      %p234 = scmp.ne.s32.totalorder %s225, %s226
      %p235 = scmp.eq.s32.totalorder %s33, 0
      %p236 = por %p234, %p235
      %p237 = scmp.ne.s32.totalorder %s225, %s226
      %p238 = scmp.eq.s32.totalorder %s34, 5
      %p239 = por %p237, %p238
      %p241 = scmp.ne.s32.totalorder %s226, %s240
      %p242 = scmp.eq.s32.totalorder %s34, 0
      %p243 = por %p241, %p242
      %s244 = ssub.s32 %s35, %s47
      %p245 = scmp.eq.s32.totalorder %s244, 0
      %s247 = sadd.s32 %s246, 1
      %s248 = scalar_select %p245, %s246, %s247
      %p251 = pneg %p245
      %p252 = scmp.eq.s32.totalorder %s28, 5
      %p253 = por %p251, %p252
      %p254 = scmp.ne.s32.totalorder %s246, %s249
      %p255 = scmp.eq.s32.totalorder %s28, 0
      %p256 = por %p254, %p255
      %p257 = scmp.ne.s32.totalorder %s246, %s249
      %p258 = scmp.eq.s32.totalorder %s33, 5
      %p259 = por %p257, %p258
      %p260 = scmp.ne.s32.totalorder %s249, %s250
      %p261 = scmp.eq.s32.totalorder %s33, 0
      %p262 = por %p260, %p261
      %p263 = scmp.ne.s32.totalorder %s249, %s250
      %p264 = scmp.eq.s32.totalorder %s34, 5
      %p265 = por %p263, %p264
      %p267 = scmp.ne.s32.totalorder %s250, %s266
      %p268 = scmp.eq.s32.totalorder %s34, 0
      %p269 = por %p267, %p268
      %p270 = scmp.le.s32.totalorder 1, %s28
      %p271 = scmp.lt.s32.totalorder %s28, 7
      %p272 = pnand %p270, %p271
      %p273 = pneg %p272
      // Predicated region
      $region9: #{conv2d_subsampling_forward.3} parent=5 // pred_check
        _
      $region10: #{conv2d_subsampling_forward.3} parent=5 // pred_check_branch
        %275 = sbr.rel (%p272) target = $region12
      $region11: #{conv2d_subsampling_forward.3} parent=5 // pred_region
        %s276 = ssub.s32 %s28, 1
        // Predicated region
        $region13: #{conv2d_subsampling_forward.3} parent=11 // pred_check
          %p277 = pneg %p147
        $region14: #{conv2d_subsampling_forward.3} parent=11 // pred_check_branch
          %279 = sbr.rel (%p277) target = $region16
        $region15: #{conv2d_subsampling_forward.3} parent=11 // pred_region
          %s281 = ssub.s32 9216, 9216
          %282 = vsyncadd [#allocation9], %s281
          %s283 = sshll.u32 [#allocation8], 4
          %s284 = int_to_ptr.vmem [resolvable:$true] %s283
          %289 = dma.hbm_to_vmem [thread:$0]  %s3, 9216, %s284, [#allocation9], 64, 64, 4
        $region16: #{conv2d_subsampling_forward.3} parent=11 // pred_fallthru
          _
        // Predicated region
        $region17: #{conv2d_subsampling_forward.3} parent=11 // pred_check
          %p290 = pneg %p168
        $region18: #{conv2d_subsampling_forward.3} parent=11 // pred_check_branch
          %292 = sbr.rel (%p290) target = $region20
        $region19: #{conv2d_subsampling_forward.3} parent=11 // pred_region
          %s294 = ssub.s32 16, 16
          %295 = vsyncadd [#allocation9], %s294
          %s297 = sshll.u32 [#allocation10], 4
          %s298 = int_to_ptr.vmem [resolvable:$true] %s297
          %300 = dma.hbm_to_vmem [thread:$0]  %s4, 16, %s298, [#allocation9]
        $region20: #{conv2d_subsampling_forward.3} parent=11 // pred_fallthru
          _
        // Predicated region
        $region21: #{conv2d_subsampling_forward.3} parent=11 // pred_check
          %p301 = pneg %p215
        $region22: #{conv2d_subsampling_forward.3} parent=11 // pred_check_branch
          %303 = sbr.rel (%p301) target = $region24
        $region23: #{conv2d_subsampling_forward.3} parent=11 // pred_region
          %s305 = ssub.s32 16, 16
          %306 = vsyncadd [#allocation12], %s305
          %s308 = sshll.u32 [#allocation13], 4
          %s309 = int_to_ptr.vmem [resolvable:$true] %s308
          %311 = dma.hbm_to_vmem [thread:$0]  %s6, 16, %s309, [#allocation12]
        $region24: #{conv2d_subsampling_forward.3} parent=11 // pred_fallthru
          _
        // Predicated region
        $region25: #{conv2d_subsampling_forward.3} parent=11 // pred_check
          %p312 = pneg %p236
        $region26: #{conv2d_subsampling_forward.3} parent=11 // pred_check_branch
          %314 = sbr.rel (%p312) target = $region28
        $region27: #{conv2d_subsampling_forward.3} parent=11 // pred_region
          %s316 = ssub.s32 64, 64
          %317 = vsyncadd [#allocation15], %s316
          %s319 = sshll.u32 [#allocation14], 4
          %s320 = int_to_ptr.vmem [resolvable:$true] %s319
          %322 = dma.hbm_to_vmem [thread:$0]  %s7, 64, %s320, [#allocation15]
        $region28: #{conv2d_subsampling_forward.3} parent=11 // pred_fallthru
          _
      $region12: #{conv2d_subsampling_forward.3} parent=5 // pred_fallthru
        _
      %p323 = scmp.lt.s32.totalorder %s28, 6
      // Predicated region
      $region29: #{conv2d_subsampling_forward.3} parent=5 // pred_check
        %p324 = pneg %p323
      $region30: #{conv2d_subsampling_forward.3} parent=5 // pred_check_branch
        %326 = sbr.rel (%p324) target = $region32
      $region31: #{conv2d_subsampling_forward.3} parent=5 // pred_region
        // Predicated region
        $region33: #{conv2d_subsampling_forward.3} parent=31 // pred_check
          %p327 = pneg %p62
        $region34: #{conv2d_subsampling_forward.3} parent=31 // pred_check_branch
          %329 = sbr.rel (%p327) target = $region36
        $region35: #{conv2d_subsampling_forward.3} parent=31 // pred_region
          %s330 = sand.u32 %s52, 1
          %s331 = scalar_lea.sflag [#allocation3], %s330
          %s332 = sand.u32 %s52, 1
          %s333 = smul.addr %s332, 4
          %s334 = scalar_lea.vmem [#allocation2], %s333
          %s336 = ssub.s32 64, 64
          %337 = vsyncadd %s331, %s336
          %s338 = smul.addr %s35, 16
          %s339 = sadd.s32 %s36, %s338
          %s340 = smul.addr %s339, 32
          %s341 = scalar_lea.hbm %s0, %s340
          %s342 = sshll.u32 %s334, 4
          %s343 = int_to_ptr.vmem [resolvable:$true] %s342
          %348 = dma.hbm_to_vmem [thread:$0]  %s341, 64, %s343, %s331, 128, 32, 2
        $region36: #{conv2d_subsampling_forward.3} parent=31 // pred_fallthru
          _
        // Predicated region
        $region37: #{conv2d_subsampling_forward.3} parent=31 // pred_check
          %p349 = pneg %p90
        $region38: #{conv2d_subsampling_forward.3} parent=31 // pred_check_branch
          %351 = sbr.rel (%p349) target = $region40
        $region39: #{conv2d_subsampling_forward.3} parent=31 // pred_region
          %s352 = sand.u32 %s28, 1
          %s353 = scalar_lea.sflag [#allocation6], %s352
          %s354 = sand.u32 %s80, 1
          %s355 = smul.addr %s354, 4
          %s356 = scalar_lea.vmem [#allocation5], %s355
          %s358 = ssub.s32 64, 64
          %359 = vsyncadd %s353, %s358
          %s360 = sadd.s32 %s36, 8
          %s361 = smul.addr %s35, 16
          %s362 = sadd.s32 %s360, %s361
          %s363 = smul.addr %s362, 32
          %s364 = scalar_lea.hbm %s1, %s363
          %s365 = sshll.u32 %s356, 4
          %s366 = int_to_ptr.vmem [resolvable:$true] %s365
          %371 = dma.hbm_to_vmem [thread:$0]  %s364, 64, %s366, %s353, 128, 32, 2
        $region40: #{conv2d_subsampling_forward.3} parent=31 // pred_fallthru
          _
        // Predicated region
        $region41: #{conv2d_subsampling_forward.3} parent=31 // pred_check
          %p372 = pneg %p120
        $region42: #{conv2d_subsampling_forward.3} parent=31 // pred_check_branch
          %374 = sbr.rel (%p372) target = $region44
        $region43: #{conv2d_subsampling_forward.3} parent=31 // pred_region
          %s375 = sand.u32 %s28, 1
          %s376 = scalar_lea.sflag [#allocation6], %s375
          %s377 = sand.u32 %s110, 1
          %s378 = smul.addr %s377, 4
          %s379 = scalar_lea.vmem [#allocation7], %s378
          %s380 = sadd.s32 %s36, 1
          %s382 = ssub.s32 64, 64
          %383 = vsyncadd %s376, %s382
          %s384 = smul.addr %s35, 16
          %s385 = sadd.s32 %s380, %s384
          %s386 = smul.addr %s385, 32
          %s387 = scalar_lea.hbm %s2, %s386
          %s388 = sshll.u32 %s379, 4
          %s389 = int_to_ptr.vmem [resolvable:$true] %s388
          %394 = dma.hbm_to_vmem [thread:$0]  %s387, 64, %s389, %s376, 128, 32, 2
        $region44: #{conv2d_subsampling_forward.3} parent=31 // pred_fallthru
          _
        // Predicated region
        $region45: #{conv2d_subsampling_forward.3} parent=31 // pred_check
          %p395 = pneg %p188
        $region46: #{conv2d_subsampling_forward.3} parent=31 // pred_check_branch
          %397 = sbr.rel (%p395) target = $region48
        $region47: #{conv2d_subsampling_forward.3} parent=31 // pred_region
          %s398 = sand.u32 %s28, 1
          %s399 = scalar_lea.sflag [#allocation12], %s398
          %s400 = sand.u32 %s178, 1
          %s401 = smul.addr %s400, 64
          %s402 = scalar_lea.vmem [#allocation11], %s401
          %s403 = smul.u32 16, %s36
          %s405 = ssub.s32 1024, 1024
          %406 = vsyncadd %s399, %s405
          %s407 = smul.addr %s403, 64
          %s408 = scalar_lea.hbm %s5, %s407
          %s409 = sshll.u32 %s402, 4
          %s410 = int_to_ptr.vmem [resolvable:$true] %s409
          %415 = dma.hbm_to_vmem [thread:$0]  %s408, 1024, %s410, %s399, 64, 64, 4
        $region48: #{conv2d_subsampling_forward.3} parent=31 // pred_fallthru
          _
      $region32: #{conv2d_subsampling_forward.3} parent=5 // pred_fallthru
        _
      %p416 = scmp.le.s32.totalorder 1, %s28
      %p417 = scmp.lt.s32.totalorder %s28, 7
      %p418 = pnand %p416, %p417
      %p419 = pneg %p418
      // Predicated region
      $region49: #{conv2d_subsampling_forward.3} parent=5 // pred_check
        _
      $region50: #{conv2d_subsampling_forward.3} parent=5 // pred_check_branch
        %421 = sbr.rel (%p418) target = $region52
      $region51: #{conv2d_subsampling_forward.3} parent=5 // pred_region
        %s422 = ssub.s32 %s28, 1
        %s423 = sand.u32 %s55, 1
        %s424 = scalar_lea.sflag [#allocation3], %s423
        %s425 = sand.u32 %s55, 1
        %s426 = smul.addr %s425, 4
        %s427 = scalar_lea.vmem [#allocation2], %s426
        // Predicated region
        $region53: #{conv2d_subsampling_forward.3} parent=51 // pred_check
          %p428 = pneg %p68
        $region54: #{conv2d_subsampling_forward.3} parent=51 // pred_check_branch
          %430 = sbr.rel (%p428) target = $region56
        $region55: #{conv2d_subsampling_forward.3} parent=51 // pred_region
          %431 = dma.done %s424, 64
        $region56: #{conv2d_subsampling_forward.3} parent=51 // pred_fallthru
          _
        %s432 = sand.u32 %s33, 1
        %s433 = scalar_lea.sflag [#allocation6], %s432
        %s434 = sand.u32 %s83, 1
        %s435 = smul.addr %s434, 4
        %s436 = scalar_lea.vmem [#allocation5], %s435
        // Predicated region
        $region57: #{conv2d_subsampling_forward.3} parent=51 // pred_check
          %p437 = pneg %p96
        $region58: #{conv2d_subsampling_forward.3} parent=51 // pred_check_branch
          %439 = sbr.rel (%p437) target = $region60
        $region59: #{conv2d_subsampling_forward.3} parent=51 // pred_region
          %440 = dma.done %s433, 64
        $region60: #{conv2d_subsampling_forward.3} parent=51 // pred_fallthru
          _
        %s441 = sand.u32 %s33, 1
        %s442 = scalar_lea.sflag [#allocation6], %s441
        %s443 = sand.u32 %s113, 1
        %s444 = smul.addr %s443, 4
        %s445 = scalar_lea.vmem [#allocation7], %s444
        // Predicated region
        $region61: #{conv2d_subsampling_forward.3} parent=51 // pred_check
          %p446 = pneg %p126
        $region62: #{conv2d_subsampling_forward.3} parent=51 // pred_check_branch
          %448 = sbr.rel (%p446) target = $region64
        $region63: #{conv2d_subsampling_forward.3} parent=51 // pred_region
          %449 = dma.done %s442, 64
        $region64: #{conv2d_subsampling_forward.3} parent=51 // pred_fallthru
          _
        // Predicated region
        $region65: #{conv2d_subsampling_forward.3} parent=51 // pred_check
          %p450 = pneg %p147
        $region66: #{conv2d_subsampling_forward.3} parent=51 // pred_check_branch
          %452 = sbr.rel (%p450) target = $region68
        $region67: #{conv2d_subsampling_forward.3} parent=51 // pred_region
          %453 = dma.done [#allocation9], 9216
        $region68: #{conv2d_subsampling_forward.3} parent=51 // pred_fallthru
          _
        // Predicated region
        $region69: #{conv2d_subsampling_forward.3} parent=51 // pred_check
          %p454 = pneg %p168
        $region70: #{conv2d_subsampling_forward.3} parent=51 // pred_check_branch
          %456 = sbr.rel (%p454) target = $region72
        $region71: #{conv2d_subsampling_forward.3} parent=51 // pred_region
          %457 = dma.done [#allocation9], 16
        $region72: #{conv2d_subsampling_forward.3} parent=51 // pred_fallthru
          _
        %s458 = sand.u32 %s33, 1
        %s459 = scalar_lea.sflag [#allocation12], %s458
        %s460 = sand.u32 %s181, 1
        %s461 = smul.addr %s460, 64
        %s462 = scalar_lea.vmem [#allocation11], %s461
        // Predicated region
        $region73: #{conv2d_subsampling_forward.3} parent=51 // pred_check
          %p463 = pneg %p194
        $region74: #{conv2d_subsampling_forward.3} parent=51 // pred_check_branch
          %465 = sbr.rel (%p463) target = $region76
        $region75: #{conv2d_subsampling_forward.3} parent=51 // pred_region
          %466 = dma.done %s459, 1024
        $region76: #{conv2d_subsampling_forward.3} parent=51 // pred_fallthru
          _
        // Predicated region
        $region77: #{conv2d_subsampling_forward.3} parent=51 // pred_check
          %p467 = pneg %p215
        $region78: #{conv2d_subsampling_forward.3} parent=51 // pred_check_branch
          %469 = sbr.rel (%p467) target = $region80
        $region79: #{conv2d_subsampling_forward.3} parent=51 // pred_region
          %470 = dma.done [#allocation12], 16
        $region80: #{conv2d_subsampling_forward.3} parent=51 // pred_fallthru
          _
        // Predicated region
        $region81: #{conv2d_subsampling_forward.3} parent=51 // pred_check
          %p471 = pneg %p236
        $region82: #{conv2d_subsampling_forward.3} parent=51 // pred_check_branch
          %473 = sbr.rel (%p471) target = $region84
        $region83: #{conv2d_subsampling_forward.3} parent=51 // pred_region
          %474 = dma.done [#allocation15], 64
        $region84: #{conv2d_subsampling_forward.3} parent=51 // pred_fallthru
          _
        %s475 = sand.u32 %s55, 1
        %s476 = scalar_lea.sflag [#allocation3], %s475
        %s477 = sand.u32 %s55, 1
        %s478 = smul.addr %s477, 4
        %s479 = scalar_lea.vmem [#allocation2], %s478
        %p480 = pneg %p68
        %p481 = pneg %p65
        %s482 = sand.u32 %s33, 1
        %s483 = scalar_lea.sflag [#allocation6], %s482
        %s484 = sand.u32 %s83, 1
        %s485 = smul.addr %s484, 4
        %s486 = scalar_lea.vmem [#allocation5], %s485
        %p487 = pneg %p96
        %p488 = pneg %p93
        %s489 = sand.u32 %s33, 1
        %s490 = scalar_lea.sflag [#allocation6], %s489
        %s491 = sand.u32 %s113, 1
        %s492 = smul.addr %s491, 4
        %s493 = scalar_lea.vmem [#allocation7], %s492
        %p494 = pneg %p126
        %p495 = pneg %p123
        %p496 = pneg %p147
        %p497 = pneg %p144
        %p498 = pneg %p168
        %p499 = pneg %p165
        %s500 = sand.u32 %s33, 1
        %s501 = scalar_lea.sflag [#allocation12], %s500
        %s502 = sand.u32 %s181, 1
        %s503 = smul.addr %s502, 64
        %s504 = scalar_lea.vmem [#allocation11], %s503
        %p505 = pneg %p194
        %p506 = pneg %p191
        %p507 = pneg %p215
        %p508 = pneg %p212
        %p509 = pneg %p236
        %p510 = pneg %p233
        %p511 = pneg %p262
        %p512 = pneg %p259
        %s513 = sand.u32 %s249, 1
        %s514 = scalar_lea.sflag [#allocation4], %s513
        %s515 = sand.u32 %s249, 1
        %s516 = smul.addr %s515, 4
        %s517 = scalar_lea.vmem [#allocation16], %s516
        %s518 = sadd.s32 %s38, 1
        %s519 = smul.u32 16, %s38
        %v521 = vld [vmem:[#allocation10] sm:$0x1]
        %v523 = vlaneseq
        %v524 = vshrl.u32 %v523, 7
        %v525 = vsub.s32 0, %v524
        %v526 = vrot.slane %v521, %v525
        %v528 = vadd.f32 %v526, 0.0
        %v529 = vld [vmem:[%s427] sm:$0x3]
        %v530 = vld [vmem:[#allocation8] sm:$0xf]
        %v531 = vld [vmem:[#allocation8 + $0x4] sm:$0xf]
        %v532 = vld [vmem:[#allocation8 + $0x8] sm:$0xf]
        %v533 = vld [vmem:[#allocation8 + $0xc] sm:$0xf]
        %v534 = vld [vmem:[#allocation8 + $0x10] sm:$0xf]
        %v535 = vld [vmem:[#allocation8 + $0x14] sm:$0xf]
        %v536 = vld [vmem:[#allocation8 + $0x18] sm:$0xf]
        %v537 = vld [vmem:[#allocation8 + $0x1c] sm:$0xf]
        %v538 = vld [vmem:[#allocation8 + $0x20] sm:$0xf]
        %v539 = vld [vmem:[#allocation8 + $0x24] sm:$0xf]
        %v540 = vld [vmem:[#allocation8 + $0x28] sm:$0xf]
        %v541 = vld [vmem:[#allocation8 + $0x2c] sm:$0xf]
        %v542 = vld [vmem:[#allocation8 + $0x30] sm:$0xf]
        %v543 = vld [vmem:[#allocation8 + $0x34] sm:$0xf]
        %v544 = vld [vmem:[#allocation8 + $0x38] sm:$0xf]
        %v545 = vld [vmem:[#allocation8 + $0x3c] sm:$0xf]
        %v562 = vunpack.c.l.b16 %v530
        %v563 = vunpack.c.l.b16 %v531
        %v564 = vunpack.c.l.b16 %v532
        %v565 = vunpack.c.l.b16 %v533
        %v566 = vunpack.c.l.b16 %v534
        %v567 = vunpack.c.l.b16 %v535
        %v568 = vunpack.c.l.b16 %v536
        %v569 = vunpack.c.l.b16 %v537
        %v570 = vunpack.c.l.b16 %v538
        %v571 = vunpack.c.l.b16 %v539
        %v572 = vunpack.c.l.b16 %v540
        %v573 = vunpack.c.l.b16 %v541
        %v574 = vunpack.c.l.b16 %v542
        %v575 = vunpack.c.l.b16 %v543
        %v576 = vunpack.c.l.b16 %v544
        %v577 = vunpack.c.l.b16 %v545
        %v578 = vpack.c.b16 %v563, %v562
        %v579 = vpack.c.b16 %v565, %v564
        %v580 = vpack.c.b16 %v567, %v566
        %v581 = vpack.c.b16 %v569, %v568
        %v582 = vpack.c.b16 %v571, %v570
        %v583 = vpack.c.b16 %v573, %v572
        %v584 = vpack.c.b16 %v575, %v574
        %v585 = vpack.c.b16 %v577, %v576
        %594 = vmatprep.subr.bf16.mxu0 0
        %595 = vmatpush1.bf16.msra.mxu0 %v578
        %596 = vmatprep.subr.bf16.mxu0 0
        %597 = vmatpush1.bf16.msra.mxu0 %v579
        %598 = vmatprep.subr.bf16.mxu0 0
        %599 = vmatpush1.bf16.msra.mxu0 %v580
        %600 = vmatprep.subr.bf16.mxu0 0
        %601 = vmatpush1.bf16.msra.mxu0 %v581
        %602 = vmatprep.subr.bf16.mxu0 0
        %603 = vmatpush1.bf16.msra.mxu0 %v582
        %604 = vmatprep.subr.bf16.mxu0 0
        %605 = vmatpush1.bf16.msra.mxu0 %v583
        %606 = vmatprep.subr.bf16.mxu0 0
        %607 = vmatpush1.bf16.msra.mxu0 %v584
        %608 = vmatprep.subr.bf16.mxu0 0
        %609 = vmatpush1.bf16.msra.mxu0 %v585
        %610 = vmatprep.subr.bf16.mxu0 0
        %611 = vmatpush1.bf16.msra.mxu0 0
        %612 = vmatprep.subr.bf16.mxu0 0
        %613 = vmatpush1.bf16.msra.mxu0 0
        %614 = vmatprep.subr.bf16.mxu0 0
        %615 = vmatpush1.bf16.msra.mxu0 0
        %616 = vmatprep.subr.bf16.mxu0 0
        %617 = vmatpush1.bf16.msra.mxu0 0
        %618 = vmatprep.subr.bf16.mxu0 0
        %619 = vmatpush1.bf16.msra.mxu0 0
        %620 = vmatprep.subr.bf16.mxu0 0
        %621 = vmatpush1.bf16.msra.mxu0 0
        %622 = vmatprep.subr.bf16.mxu0 0
        %623 = vmatpush1.bf16.msra.mxu0 0
        %624 = vmatprep.subr.bf16.mxu0 0
        %625 = vmatpush1.bf16.msra.mxu0 0
        %626 = vmatprep.mubr.bf16.mxu0 0
        %627 = vmatmul.mubr.bf16.gmra.mrb[0].mxu0 %v529
        %v628 = vpop.f32.mrb[0].mxu0
        %v629 = vadd.f32 0.0, %v628
        %v630 = vpop.f32.mrb[0].mxu0
        %v631 = vpop.f32.mrb[0].mxu0
        %v632 = vpop.f32.mrb[0].mxu0
        %633 = vdwg.mxu0
        %v634 = vadd.f32 %v528, %v629
        %s635 = scalar_lea.vmem %s427, 2 [#allocation2]
        %v636 = vld [vmem:[%s635] sm:$0x3]
        %s637 = scalar_lea.vmem [#allocation8], 192
        %v638 = vld [vmem:[%s637] sm:$0xf]
        %v639 = vld [vmem:[%s637 + $0x4] sm:$0xf]
        %v640 = vld [vmem:[%s637 + $0x8] sm:$0xf]
        %v641 = vld [vmem:[%s637 + $0xc] sm:$0xf]
        %v642 = vld [vmem:[%s637 + $0x10] sm:$0xf]
        %v643 = vld [vmem:[%s637 + $0x14] sm:$0xf]
        %v644 = vld [vmem:[%s637 + $0x18] sm:$0xf]
        %v645 = vld [vmem:[%s637 + $0x1c] sm:$0xf]
        %v646 = vld [vmem:[%s637 + $0x20] sm:$0xf]
        %v647 = vld [vmem:[%s637 + $0x24] sm:$0xf]
        %v648 = vld [vmem:[%s637 + $0x28] sm:$0xf]
        %v649 = vld [vmem:[%s637 + $0x2c] sm:$0xf]
        %v650 = vld [vmem:[%s637 + $0x30] sm:$0xf]
        %v651 = vld [vmem:[%s637 + $0x34] sm:$0xf]
        %v652 = vld [vmem:[%s637 + $0x38] sm:$0xf]
        %v653 = vld [vmem:[%s637 + $0x3c] sm:$0xf]
        %v670 = vunpack.c.l.b16 %v638
        %v671 = vunpack.c.l.b16 %v639
        %v672 = vunpack.c.l.b16 %v640
        %v673 = vunpack.c.l.b16 %v641
        %v674 = vunpack.c.l.b16 %v642
        %v675 = vunpack.c.l.b16 %v643
        %v676 = vunpack.c.l.b16 %v644
        %v677 = vunpack.c.l.b16 %v645
        %v678 = vunpack.c.l.b16 %v646
        %v679 = vunpack.c.l.b16 %v647
        %v680 = vunpack.c.l.b16 %v648
        %v681 = vunpack.c.l.b16 %v649
        %v682 = vunpack.c.l.b16 %v650
        %v683 = vunpack.c.l.b16 %v651
        %v684 = vunpack.c.l.b16 %v652
        %v685 = vunpack.c.l.b16 %v653
        %v686 = vpack.c.b16 %v671, %v670
        %v687 = vpack.c.b16 %v673, %v672
        %v688 = vpack.c.b16 %v675, %v674
        %v689 = vpack.c.b16 %v677, %v676
        %v690 = vpack.c.b16 %v679, %v678
        %v691 = vpack.c.b16 %v681, %v680
        %v692 = vpack.c.b16 %v683, %v682
        %v693 = vpack.c.b16 %v685, %v684
        %702 = vmatprep.subr.bf16.mxu0 0
        %703 = vmatpush1.bf16.msra.mxu0 %v686
        %704 = vmatprep.subr.bf16.mxu0 0
        %705 = vmatpush1.bf16.msra.mxu0 %v687
        %706 = vmatprep.subr.bf16.mxu0 0
        %707 = vmatpush1.bf16.msra.mxu0 %v688
        %708 = vmatprep.subr.bf16.mxu0 0
        %709 = vmatpush1.bf16.msra.mxu0 %v689
        %710 = vmatprep.subr.bf16.mxu0 0
        %711 = vmatpush1.bf16.msra.mxu0 %v690
        %712 = vmatprep.subr.bf16.mxu0 0
        %713 = vmatpush1.bf16.msra.mxu0 %v691
        %714 = vmatprep.subr.bf16.mxu0 0
        %715 = vmatpush1.bf16.msra.mxu0 %v692
        %716 = vmatprep.subr.bf16.mxu0 0
        %717 = vmatpush1.bf16.msra.mxu0 %v693
        %718 = vmatprep.subr.bf16.mxu0 0
        %719 = vmatpush1.bf16.msra.mxu0 0
        %720 = vmatprep.subr.bf16.mxu0 0
        %721 = vmatpush1.bf16.msra.mxu0 0
        %722 = vmatprep.subr.bf16.mxu0 0
        %723 = vmatpush1.bf16.msra.mxu0 0
        %724 = vmatprep.subr.bf16.mxu0 0
        %725 = vmatpush1.bf16.msra.mxu0 0
        %726 = vmatprep.subr.bf16.mxu0 0
        %727 = vmatpush1.bf16.msra.mxu0 0
        %728 = vmatprep.subr.bf16.mxu0 0
        %729 = vmatpush1.bf16.msra.mxu0 0
        %730 = vmatprep.subr.bf16.mxu0 0
        %731 = vmatpush1.bf16.msra.mxu0 0
        %732 = vmatprep.subr.bf16.mxu0 0
        %733 = vmatpush1.bf16.msra.mxu0 0
        %734 = vmatprep.mubr.bf16.mxu0 0
        %735 = vmatmul.mubr.bf16.gmra.mrb[0].mxu0 %v636
        %v736 = vpop.f32.mrb[0].mxu0
        %v737 = vadd.f32 0.0, %v736
        %v738 = vpop.f32.mrb[0].mxu0
        %v739 = vpop.f32.mrb[0].mxu0
        %v740 = vpop.f32.mrb[0].mxu0
        %741 = vdwg.mxu0
        %v742 = vadd.f32 %v634, %v737
        %s743 = scalar_lea.vmem [#allocation8], 384
        %v744 = vld [vmem:[%s743] sm:$0xf]
        %v745 = vld [vmem:[%s743 + $0x4] sm:$0xf]
        %v746 = vld [vmem:[%s743 + $0x8] sm:$0xf]
        %v747 = vld [vmem:[%s743 + $0xc] sm:$0xf]
        %v748 = vld [vmem:[%s743 + $0x10] sm:$0xf]
        %v749 = vld [vmem:[%s743 + $0x14] sm:$0xf]
        %v750 = vld [vmem:[%s743 + $0x18] sm:$0xf]
        %v751 = vld [vmem:[%s743 + $0x1c] sm:$0xf]
        %v752 = vld [vmem:[%s743 + $0x20] sm:$0xf]
        %v753 = vld [vmem:[%s743 + $0x24] sm:$0xf]
        %v754 = vld [vmem:[%s743 + $0x28] sm:$0xf]
        %v755 = vld [vmem:[%s743 + $0x2c] sm:$0xf]
        %v756 = vld [vmem:[%s743 + $0x30] sm:$0xf]
        %v757 = vld [vmem:[%s743 + $0x34] sm:$0xf]
        %v758 = vld [vmem:[%s743 + $0x38] sm:$0xf]
        %v759 = vld [vmem:[%s743 + $0x3c] sm:$0xf]
        %v762 = vunpack.c.l.s4 1983009808
        %v763 = vunpack.c.0.s8 %v762
        %v764 = vlaneseq
        %v765 = vshrl.u32 %v764, 7
        %v766 = vsub.s32 %v763, %v765
        %v767 = vrot.slane %v529, %v766
        %v769 = vshrl.u32 %v767, 16
        %v771 = vshll.u32 %v767, 16
        %v773 = vrot.slane %v771, 1
        %v774 = vor.u32 %v769, %v773
        %v792 = vunpack.c.l.b16 %v744
        %v793 = vunpack.c.l.b16 %v745
        %v794 = vunpack.c.l.b16 %v746
        %v795 = vunpack.c.l.b16 %v747
        %v796 = vunpack.c.l.b16 %v748
        %v797 = vunpack.c.l.b16 %v749
        %v798 = vunpack.c.l.b16 %v750
        %v799 = vunpack.c.l.b16 %v751
        %v800 = vunpack.c.l.b16 %v752
        %v801 = vunpack.c.l.b16 %v753
        %v802 = vunpack.c.l.b16 %v754
        %v803 = vunpack.c.l.b16 %v755
        %v804 = vunpack.c.l.b16 %v756
        %v805 = vunpack.c.l.b16 %v757
        %v806 = vunpack.c.l.b16 %v758
        %v807 = vunpack.c.l.b16 %v759
        %v808 = vpack.c.b16 %v793, %v792
        %v809 = vpack.c.b16 %v795, %v794
        %v810 = vpack.c.b16 %v797, %v796
        %v811 = vpack.c.b16 %v799, %v798
        %v812 = vpack.c.b16 %v801, %v800
        %v813 = vpack.c.b16 %v803, %v802
        %v814 = vpack.c.b16 %v805, %v804
        %v815 = vpack.c.b16 %v807, %v806
        %824 = vmatprep.subr.bf16.mxu0 0
        %825 = vmatpush1.bf16.msra.mxu0 %v808
        %826 = vmatprep.subr.bf16.mxu0 0
        %827 = vmatpush1.bf16.msra.mxu0 %v809
        %828 = vmatprep.subr.bf16.mxu0 0
        %829 = vmatpush1.bf16.msra.mxu0 %v810
        %830 = vmatprep.subr.bf16.mxu0 0
        %831 = vmatpush1.bf16.msra.mxu0 %v811
        %832 = vmatprep.subr.bf16.mxu0 0
        %833 = vmatpush1.bf16.msra.mxu0 %v812
        %834 = vmatprep.subr.bf16.mxu0 0
        %835 = vmatpush1.bf16.msra.mxu0 %v813
        %836 = vmatprep.subr.bf16.mxu0 0
        %837 = vmatpush1.bf16.msra.mxu0 %v814
        %838 = vmatprep.subr.bf16.mxu0 0
        %839 = vmatpush1.bf16.msra.mxu0 %v815
        %840 = vmatprep.subr.bf16.mxu0 0
        %841 = vmatpush1.bf16.msra.mxu0 0
        %842 = vmatprep.subr.bf16.mxu0 0
        %843 = vmatpush1.bf16.msra.mxu0 0
        %844 = vmatprep.subr.bf16.mxu0 0
        %845 = vmatpush1.bf16.msra.mxu0 0
        %846 = vmatprep.subr.bf16.mxu0 0
        %847 = vmatpush1.bf16.msra.mxu0 0
        %848 = vmatprep.subr.bf16.mxu0 0
        %849 = vmatpush1.bf16.msra.mxu0 0
        %850 = vmatprep.subr.bf16.mxu0 0
        %851 = vmatpush1.bf16.msra.mxu0 0
        %852 = vmatprep.subr.bf16.mxu0 0
        %853 = vmatpush1.bf16.msra.mxu0 0
        %854 = vmatprep.subr.bf16.mxu0 0
        %855 = vmatpush1.bf16.msra.mxu0 0
        %856 = vmatprep.mubr.bf16.mxu0 0
        %857 = vmatmul.mubr.bf16.gmra.mrb[0].mxu0 %v774
        %v858 = vpop.f32.mrb[0].mxu0
        %v859 = vadd.f32 0.0, %v858
        %v860 = vpop.f32.mrb[0].mxu0
        %v861 = vpop.f32.mrb[0].mxu0
        %v862 = vpop.f32.mrb[0].mxu0
        %863 = vdwg.mxu0
        %v864 = vadd.f32 %v742, %v859
        %v865 = vld [vmem:[%s436] sm:$0x3]
        %s866 = scalar_lea.vmem [#allocation8], 64
        %v867 = vld [vmem:[%s866] sm:$0xf]
        %v868 = vld [vmem:[%s866 + $0x4] sm:$0xf]
        %v869 = vld [vmem:[%s866 + $0x8] sm:$0xf]
        %v870 = vld [vmem:[%s866 + $0xc] sm:$0xf]
        %v871 = vld [vmem:[%s866 + $0x10] sm:$0xf]
        %v872 = vld [vmem:[%s866 + $0x14] sm:$0xf]
        %v873 = vld [vmem:[%s866 + $0x18] sm:$0xf]
        %v874 = vld [vmem:[%s866 + $0x1c] sm:$0xf]
        %v875 = vld [vmem:[%s866 + $0x20] sm:$0xf]
        %v876 = vld [vmem:[%s866 + $0x24] sm:$0xf]
        %v877 = vld [vmem:[%s866 + $0x28] sm:$0xf]
        %v878 = vld [vmem:[%s866 + $0x2c] sm:$0xf]
        %v879 = vld [vmem:[%s866 + $0x30] sm:$0xf]
        %v880 = vld [vmem:[%s866 + $0x34] sm:$0xf]
        %v881 = vld [vmem:[%s866 + $0x38] sm:$0xf]
        %v882 = vld [vmem:[%s866 + $0x3c] sm:$0xf]
        %v899 = vunpack.c.l.b16 %v867
        %v900 = vunpack.c.l.b16 %v868
        %v901 = vunpack.c.l.b16 %v869
        %v902 = vunpack.c.l.b16 %v870
        %v903 = vunpack.c.l.b16 %v871
        %v904 = vunpack.c.l.b16 %v872
        %v905 = vunpack.c.l.b16 %v873
        %v906 = vunpack.c.l.b16 %v874
        %v907 = vunpack.c.l.b16 %v875
        %v908 = vunpack.c.l.b16 %v876
        %v909 = vunpack.c.l.b16 %v877
        %v910 = vunpack.c.l.b16 %v878
        %v911 = vunpack.c.l.b16 %v879
        %v912 = vunpack.c.l.b16 %v880
        %v913 = vunpack.c.l.b16 %v881
        %v914 = vunpack.c.l.b16 %v882
        %v915 = vpack.c.b16 %v900, %v899
        %v916 = vpack.c.b16 %v902, %v901
        %v917 = vpack.c.b16 %v904, %v903
        %v918 = vpack.c.b16 %v906, %v905
        %v919 = vpack.c.b16 %v908, %v907
        %v920 = vpack.c.b16 %v910, %v909
        %v921 = vpack.c.b16 %v912, %v911
        %v922 = vpack.c.b16 %v914, %v913
        %931 = vmatprep.subr.bf16.mxu0 0
        %932 = vmatpush1.bf16.msra.mxu0 %v915
        %933 = vmatprep.subr.bf16.mxu0 0
        %934 = vmatpush1.bf16.msra.mxu0 %v916
        %935 = vmatprep.subr.bf16.mxu0 0
        %936 = vmatpush1.bf16.msra.mxu0 %v917
        %937 = vmatprep.subr.bf16.mxu0 0
        %938 = vmatpush1.bf16.msra.mxu0 %v918
        %939 = vmatprep.subr.bf16.mxu0 0
        %940 = vmatpush1.bf16.msra.mxu0 %v919
        %941 = vmatprep.subr.bf16.mxu0 0
        %942 = vmatpush1.bf16.msra.mxu0 %v920
        %943 = vmatprep.subr.bf16.mxu0 0
        %944 = vmatpush1.bf16.msra.mxu0 %v921
        %945 = vmatprep.subr.bf16.mxu0 0
        %946 = vmatpush1.bf16.msra.mxu0 %v922
        %947 = vmatprep.subr.bf16.mxu0 0
        %948 = vmatpush1.bf16.msra.mxu0 0
        %949 = vmatprep.subr.bf16.mxu0 0
        %950 = vmatpush1.bf16.msra.mxu0 0
        %951 = vmatprep.subr.bf16.mxu0 0
        %952 = vmatpush1.bf16.msra.mxu0 0
        %953 = vmatprep.subr.bf16.mxu0 0
        %954 = vmatpush1.bf16.msra.mxu0 0
        %955 = vmatprep.subr.bf16.mxu0 0
        %956 = vmatpush1.bf16.msra.mxu0 0
        %957 = vmatprep.subr.bf16.mxu0 0
        %958 = vmatpush1.bf16.msra.mxu0 0
        %959 = vmatprep.subr.bf16.mxu0 0
        %960 = vmatpush1.bf16.msra.mxu0 0
        %961 = vmatprep.subr.bf16.mxu0 0
        %962 = vmatpush1.bf16.msra.mxu0 0
        %963 = vmatprep.mubr.bf16.mxu0 0
        %964 = vmatmul.mubr.bf16.gmra.mrb[0].mxu0 %v865
        %v965 = vpop.f32.mrb[0].mxu0
        %v966 = vadd.f32 0.0, %v965
        %v967 = vpop.f32.mrb[0].mxu0
        %v968 = vpop.f32.mrb[0].mxu0
        %v969 = vpop.f32.mrb[0].mxu0
        %970 = vdwg.mxu0
        %v971 = vadd.f32 %v864, %v966
        %s972 = scalar_lea.vmem %s436, 2 [#allocation5]
        %v973 = vld [vmem:[%s972] sm:$0x3]
        %s974 = scalar_lea.vmem [#allocation8], 256
        %v975 = vld [vmem:[%s974] sm:$0xf]
        %v976 = vld [vmem:[%s974 + $0x4] sm:$0xf]
        %v977 = vld [vmem:[%s974 + $0x8] sm:$0xf]
        %v978 = vld [vmem:[%s974 + $0xc] sm:$0xf]
        %v979 = vld [vmem:[%s974 + $0x10] sm:$0xf]
        %v980 = vld [vmem:[%s974 + $0x14] sm:$0xf]
        %v981 = vld [vmem:[%s974 + $0x18] sm:$0xf]
        %v982 = vld [vmem:[%s974 + $0x1c] sm:$0xf]
        %v983 = vld [vmem:[%s974 + $0x20] sm:$0xf]
        %v984 = vld [vmem:[%s974 + $0x24] sm:$0xf]
        %v985 = vld [vmem:[%s974 + $0x28] sm:$0xf]
        %v986 = vld [vmem:[%s974 + $0x2c] sm:$0xf]
        %v987 = vld [vmem:[%s974 + $0x30] sm:$0xf]
        %v988 = vld [vmem:[%s974 + $0x34] sm:$0xf]
        %v989 = vld [vmem:[%s974 + $0x38] sm:$0xf]
        %v990 = vld [vmem:[%s974 + $0x3c] sm:$0xf]
        %v1007 = vunpack.c.l.b16 %v975
        %v1008 = vunpack.c.l.b16 %v976
        %v1009 = vunpack.c.l.b16 %v977
        %v1010 = vunpack.c.l.b16 %v978
        %v1011 = vunpack.c.l.b16 %v979
        %v1012 = vunpack.c.l.b16 %v980
        %v1013 = vunpack.c.l.b16 %v981
        %v1014 = vunpack.c.l.b16 %v982
        %v1015 = vunpack.c.l.b16 %v983
        %v1016 = vunpack.c.l.b16 %v984
        %v1017 = vunpack.c.l.b16 %v985
        %v1018 = vunpack.c.l.b16 %v986
        %v1019 = vunpack.c.l.b16 %v987
        %v1020 = vunpack.c.l.b16 %v988
        %v1021 = vunpack.c.l.b16 %v989
        %v1022 = vunpack.c.l.b16 %v990
        %v1023 = vpack.c.b16 %v1008, %v1007
        %v1024 = vpack.c.b16 %v1010, %v1009
        %v1025 = vpack.c.b16 %v1012, %v1011
        %v1026 = vpack.c.b16 %v1014, %v1013
        %v1027 = vpack.c.b16 %v1016, %v1015
        %v1028 = vpack.c.b16 %v1018, %v1017
        %v1029 = vpack.c.b16 %v1020, %v1019
        %v1030 = vpack.c.b16 %v1022, %v1021
        %1039 = vmatprep.subr.bf16.mxu0 0
        %1040 = vmatpush1.bf16.msra.mxu0 %v1023
        %1041 = vmatprep.subr.bf16.mxu0 0
        %1042 = vmatpush1.bf16.msra.mxu0 %v1024
        %1043 = vmatprep.subr.bf16.mxu0 0
        %1044 = vmatpush1.bf16.msra.mxu0 %v1025
        %1045 = vmatprep.subr.bf16.mxu0 0
        %1046 = vmatpush1.bf16.msra.mxu0 %v1026
        %1047 = vmatprep.subr.bf16.mxu0 0
        %1048 = vmatpush1.bf16.msra.mxu0 %v1027
        %1049 = vmatprep.subr.bf16.mxu0 0
        %1050 = vmatpush1.bf16.msra.mxu0 %v1028
        %1051 = vmatprep.subr.bf16.mxu0 0
        %1052 = vmatpush1.bf16.msra.mxu0 %v1029
        %1053 = vmatprep.subr.bf16.mxu0 0
        %1054 = vmatpush1.bf16.msra.mxu0 %v1030
        %1055 = vmatprep.subr.bf16.mxu0 0
        %1056 = vmatpush1.bf16.msra.mxu0 0
        %1057 = vmatprep.subr.bf16.mxu0 0
        %1058 = vmatpush1.bf16.msra.mxu0 0
        %1059 = vmatprep.subr.bf16.mxu0 0
        %1060 = vmatpush1.bf16.msra.mxu0 0
        %1061 = vmatprep.subr.bf16.mxu0 0
        %1062 = vmatpush1.bf16.msra.mxu0 0
        %1063 = vmatprep.subr.bf16.mxu0 0
        %1064 = vmatpush1.bf16.msra.mxu0 0
        %1065 = vmatprep.subr.bf16.mxu0 0
        %1066 = vmatpush1.bf16.msra.mxu0 0
        %1067 = vmatprep.subr.bf16.mxu0 0
        %1068 = vmatpush1.bf16.msra.mxu0 0
        %1069 = vmatprep.subr.bf16.mxu0 0
        %1070 = vmatpush1.bf16.msra.mxu0 0
        %1071 = vmatprep.mubr.bf16.mxu0 0
        %1072 = vmatmul.mubr.bf16.gmra.mrb[0].mxu0 %v973
        %v1073 = vpop.f32.mrb[0].mxu0
        %v1074 = vadd.f32 0.0, %v1073
        %v1075 = vpop.f32.mrb[0].mxu0
        %v1076 = vpop.f32.mrb[0].mxu0
        %v1077 = vpop.f32.mrb[0].mxu0
        %1078 = vdwg.mxu0
        %v1079 = vadd.f32 %v971, %v1074
        %s1080 = scalar_lea.vmem [#allocation8], 448
        %v1081 = vld [vmem:[%s1080] sm:$0xf]
        %v1082 = vld [vmem:[%s1080 + $0x4] sm:$0xf]
        %v1083 = vld [vmem:[%s1080 + $0x8] sm:$0xf]
        %v1084 = vld [vmem:[%s1080 + $0xc] sm:$0xf]
        %v1085 = vld [vmem:[%s1080 + $0x10] sm:$0xf]
        %v1086 = vld [vmem:[%s1080 + $0x14] sm:$0xf]
        %v1087 = vld [vmem:[%s1080 + $0x18] sm:$0xf]
        %v1088 = vld [vmem:[%s1080 + $0x1c] sm:$0xf]
        %v1089 = vld [vmem:[%s1080 + $0x20] sm:$0xf]
        %v1090 = vld [vmem:[%s1080 + $0x24] sm:$0xf]
        %v1091 = vld [vmem:[%s1080 + $0x28] sm:$0xf]
        %v1092 = vld [vmem:[%s1080 + $0x2c] sm:$0xf]
        %v1093 = vld [vmem:[%s1080 + $0x30] sm:$0xf]
        %v1094 = vld [vmem:[%s1080 + $0x34] sm:$0xf]
        %v1095 = vld [vmem:[%s1080 + $0x38] sm:$0xf]
        %v1096 = vld [vmem:[%s1080 + $0x3c] sm:$0xf]
        %v1099 = vunpack.c.l.s4 1983009808
        %v1100 = vunpack.c.0.s8 %v1099
        %v1101 = vlaneseq
        %v1102 = vshrl.u32 %v1101, 7
        %v1103 = vsub.s32 %v1100, %v1102
        %v1104 = vrot.slane %v865, %v1103
        %v1106 = vshrl.u32 %v1104, 16
        %v1108 = vshll.u32 %v1104, 16
        %v1110 = vrot.slane %v1108, 1
        %v1111 = vor.u32 %v1106, %v1110
        %v1129 = vunpack.c.l.b16 %v1081
        %v1130 = vunpack.c.l.b16 %v1082
        %v1131 = vunpack.c.l.b16 %v1083
        %v1132 = vunpack.c.l.b16 %v1084
        %v1133 = vunpack.c.l.b16 %v1085
        %v1134 = vunpack.c.l.b16 %v1086
        %v1135 = vunpack.c.l.b16 %v1087
        %v1136 = vunpack.c.l.b16 %v1088
        %v1137 = vunpack.c.l.b16 %v1089
        %v1138 = vunpack.c.l.b16 %v1090
        %v1139 = vunpack.c.l.b16 %v1091
        %v1140 = vunpack.c.l.b16 %v1092
        %v1141 = vunpack.c.l.b16 %v1093
        %v1142 = vunpack.c.l.b16 %v1094
        %v1143 = vunpack.c.l.b16 %v1095
        %v1144 = vunpack.c.l.b16 %v1096
        %v1145 = vpack.c.b16 %v1130, %v1129
        %v1146 = vpack.c.b16 %v1132, %v1131
        %v1147 = vpack.c.b16 %v1134, %v1133
        %v1148 = vpack.c.b16 %v1136, %v1135
        %v1149 = vpack.c.b16 %v1138, %v1137
        %v1150 = vpack.c.b16 %v1140, %v1139
        %v1151 = vpack.c.b16 %v1142, %v1141
        %v1152 = vpack.c.b16 %v1144, %v1143
        %1161 = vmatprep.subr.bf16.mxu0 0
        %1162 = vmatpush1.bf16.msra.mxu0 %v1145
        %1163 = vmatprep.subr.bf16.mxu0 0
        %1164 = vmatpush1.bf16.msra.mxu0 %v1146
        %1165 = vmatprep.subr.bf16.mxu0 0
        %1166 = vmatpush1.bf16.msra.mxu0 %v1147
        %1167 = vmatprep.subr.bf16.mxu0 0
        %1168 = vmatpush1.bf16.msra.mxu0 %v1148
        %1169 = vmatprep.subr.bf16.mxu0 0
        %1170 = vmatpush1.bf16.msra.mxu0 %v1149
        %1171 = vmatprep.subr.bf16.mxu0 0
        %1172 = vmatpush1.bf16.msra.mxu0 %v1150
        %1173 = vmatprep.subr.bf16.mxu0 0
        %1174 = vmatpush1.bf16.msra.mxu0 %v1151
        %1175 = vmatprep.subr.bf16.mxu0 0
        %1176 = vmatpush1.bf16.msra.mxu0 %v1152
        %1177 = vmatprep.subr.bf16.mxu0 0
        %1178 = vmatpush1.bf16.msra.mxu0 0
        %1179 = vmatprep.subr.bf16.mxu0 0
        %1180 = vmatpush1.bf16.msra.mxu0 0
        %1181 = vmatprep.subr.bf16.mxu0 0
        %1182 = vmatpush1.bf16.msra.mxu0 0
        %1183 = vmatprep.subr.bf16.mxu0 0
        %1184 = vmatpush1.bf16.msra.mxu0 0
        %1185 = vmatprep.subr.bf16.mxu0 0
        %1186 = vmatpush1.bf16.msra.mxu0 0
        %1187 = vmatprep.subr.bf16.mxu0 0
        %1188 = vmatpush1.bf16.msra.mxu0 0
        %1189 = vmatprep.subr.bf16.mxu0 0
        %1190 = vmatpush1.bf16.msra.mxu0 0
        %1191 = vmatprep.subr.bf16.mxu0 0
        %1192 = vmatpush1.bf16.msra.mxu0 0
        %1193 = vmatprep.mubr.bf16.mxu0 0
        %1194 = vmatmul.mubr.bf16.gmra.mrb[0].mxu0 %v1111
        %v1195 = vpop.f32.mrb[0].mxu0
        %v1196 = vadd.f32 0.0, %v1195
        %v1197 = vpop.f32.mrb[0].mxu0
        %v1198 = vpop.f32.mrb[0].mxu0
        %v1199 = vpop.f32.mrb[0].mxu0
        %1200 = vdwg.mxu0
        %v1201 = vadd.f32 %v1079, %v1196
        %v1202 = vld [vmem:[%s445] sm:$0x3]
        %s1203 = scalar_lea.vmem [#allocation8], 128
        %v1204 = vld [vmem:[%s1203] sm:$0xf]
        %v1205 = vld [vmem:[%s1203 + $0x4] sm:$0xf]
        %v1206 = vld [vmem:[%s1203 + $0x8] sm:$0xf]
        %v1207 = vld [vmem:[%s1203 + $0xc] sm:$0xf]
        %v1208 = vld [vmem:[%s1203 + $0x10] sm:$0xf]
        %v1209 = vld [vmem:[%s1203 + $0x14] sm:$0xf]
        %v1210 = vld [vmem:[%s1203 + $0x18] sm:$0xf]
        %v1211 = vld [vmem:[%s1203 + $0x1c] sm:$0xf]
        %v1212 = vld [vmem:[%s1203 + $0x20] sm:$0xf]
        %v1213 = vld [vmem:[%s1203 + $0x24] sm:$0xf]
        %v1214 = vld [vmem:[%s1203 + $0x28] sm:$0xf]
        %v1215 = vld [vmem:[%s1203 + $0x2c] sm:$0xf]
        %v1216 = vld [vmem:[%s1203 + $0x30] sm:$0xf]
        %v1217 = vld [vmem:[%s1203 + $0x34] sm:$0xf]
        %v1218 = vld [vmem:[%s1203 + $0x38] sm:$0xf]
        %v1219 = vld [vmem:[%s1203 + $0x3c] sm:$0xf]
        %v1236 = vunpack.c.l.b16 %v1204
        %v1237 = vunpack.c.l.b16 %v1205
        %v1238 = vunpack.c.l.b16 %v1206
        %v1239 = vunpack.c.l.b16 %v1207
        %v1240 = vunpack.c.l.b16 %v1208
        %v1241 = vunpack.c.l.b16 %v1209
        %v1242 = vunpack.c.l.b16 %v1210
        %v1243 = vunpack.c.l.b16 %v1211
        %v1244 = vunpack.c.l.b16 %v1212
        %v1245 = vunpack.c.l.b16 %v1213
        %v1246 = vunpack.c.l.b16 %v1214
        %v1247 = vunpack.c.l.b16 %v1215
        %v1248 = vunpack.c.l.b16 %v1216
        %v1249 = vunpack.c.l.b16 %v1217
        %v1250 = vunpack.c.l.b16 %v1218
        %v1251 = vunpack.c.l.b16 %v1219
        %v1252 = vpack.c.b16 %v1237, %v1236
        %v1253 = vpack.c.b16 %v1239, %v1238
        %v1254 = vpack.c.b16 %v1241, %v1240
        %v1255 = vpack.c.b16 %v1243, %v1242
        %v1256 = vpack.c.b16 %v1245, %v1244
        %v1257 = vpack.c.b16 %v1247, %v1246
        %v1258 = vpack.c.b16 %v1249, %v1248
        %v1259 = vpack.c.b16 %v1251, %v1250
        %1268 = vmatprep.subr.bf16.mxu0 0
        %1269 = vmatpush1.bf16.msra.mxu0 %v1252
        %1270 = vmatprep.subr.bf16.mxu0 0
        %1271 = vmatpush1.bf16.msra.mxu0 %v1253
        %1272 = vmatprep.subr.bf16.mxu0 0
        %1273 = vmatpush1.bf16.msra.mxu0 %v1254
        %1274 = vmatprep.subr.bf16.mxu0 0
        %1275 = vmatpush1.bf16.msra.mxu0 %v1255
        %1276 = vmatprep.subr.bf16.mxu0 0
        %1277 = vmatpush1.bf16.msra.mxu0 %v1256
        %1278 = vmatprep.subr.bf16.mxu0 0
        %1279 = vmatpush1.bf16.msra.mxu0 %v1257
        %1280 = vmatprep.subr.bf16.mxu0 0
        %1281 = vmatpush1.bf16.msra.mxu0 %v1258
        %1282 = vmatprep.subr.bf16.mxu0 0
        %1283 = vmatpush1.bf16.msra.mxu0 %v1259
        %1284 = vmatprep.subr.bf16.mxu0 0
        %1285 = vmatpush1.bf16.msra.mxu0 0
        %1286 = vmatprep.subr.bf16.mxu0 0
        %1287 = vmatpush1.bf16.msra.mxu0 0
        %1288 = vmatprep.subr.bf16.mxu0 0
        %1289 = vmatpush1.bf16.msra.mxu0 0
        %1290 = vmatprep.subr.bf16.mxu0 0
        %1291 = vmatpush1.bf16.msra.mxu0 0
        %1292 = vmatprep.subr.bf16.mxu0 0
        %1293 = vmatpush1.bf16.msra.mxu0 0
        %1294 = vmatprep.subr.bf16.mxu0 0
        %1295 = vmatpush1.bf16.msra.mxu0 0
        %1296 = vmatprep.subr.bf16.mxu0 0
        %1297 = vmatpush1.bf16.msra.mxu0 0
        %1298 = vmatprep.subr.bf16.mxu0 0
        %1299 = vmatpush1.bf16.msra.mxu0 0
        %1300 = vmatprep.mubr.bf16.mxu0 0
        %1301 = vmatmul.mubr.bf16.gmra.mrb[0].mxu0 %v1202
        %v1302 = vpop.f32.mrb[0].mxu0
        %v1303 = vadd.f32 0.0, %v1302
        %v1304 = vpop.f32.mrb[0].mxu0
        %v1305 = vpop.f32.mrb[0].mxu0
        %v1306 = vpop.f32.mrb[0].mxu0
        %1307 = vdwg.mxu0
        %v1308 = vadd.f32 %v1201, %v1303
        %s1309 = scalar_lea.vmem %s445, 2 [#allocation7]
        %v1310 = vld [vmem:[%s1309] sm:$0x3]
        %s1311 = scalar_lea.vmem [#allocation8], 320
        %v1312 = vld [vmem:[%s1311] sm:$0xf]
        %v1313 = vld [vmem:[%s1311 + $0x4] sm:$0xf]
        %v1314 = vld [vmem:[%s1311 + $0x8] sm:$0xf]
        %v1315 = vld [vmem:[%s1311 + $0xc] sm:$0xf]
        %v1316 = vld [vmem:[%s1311 + $0x10] sm:$0xf]
        %v1317 = vld [vmem:[%s1311 + $0x14] sm:$0xf]
        %v1318 = vld [vmem:[%s1311 + $0x18] sm:$0xf]
        %v1319 = vld [vmem:[%s1311 + $0x1c] sm:$0xf]
        %v1320 = vld [vmem:[%s1311 + $0x20] sm:$0xf]
        %v1321 = vld [vmem:[%s1311 + $0x24] sm:$0xf]
        %v1322 = vld [vmem:[%s1311 + $0x28] sm:$0xf]
        %v1323 = vld [vmem:[%s1311 + $0x2c] sm:$0xf]
        %v1324 = vld [vmem:[%s1311 + $0x30] sm:$0xf]
        %v1325 = vld [vmem:[%s1311 + $0x34] sm:$0xf]
        %v1326 = vld [vmem:[%s1311 + $0x38] sm:$0xf]
        %v1327 = vld [vmem:[%s1311 + $0x3c] sm:$0xf]
        %v1344 = vunpack.c.l.b16 %v1312
        %v1345 = vunpack.c.l.b16 %v1313
        %v1346 = vunpack.c.l.b16 %v1314
        %v1347 = vunpack.c.l.b16 %v1315
        %v1348 = vunpack.c.l.b16 %v1316
        %v1349 = vunpack.c.l.b16 %v1317
        %v1350 = vunpack.c.l.b16 %v1318
        %v1351 = vunpack.c.l.b16 %v1319
        %v1352 = vunpack.c.l.b16 %v1320
        %v1353 = vunpack.c.l.b16 %v1321
        %v1354 = vunpack.c.l.b16 %v1322
        %v1355 = vunpack.c.l.b16 %v1323
        %v1356 = vunpack.c.l.b16 %v1324
        %v1357 = vunpack.c.l.b16 %v1325
        %v1358 = vunpack.c.l.b16 %v1326
        %v1359 = vunpack.c.l.b16 %v1327
        %v1360 = vpack.c.b16 %v1345, %v1344
        %v1361 = vpack.c.b16 %v1347, %v1346
        %v1362 = vpack.c.b16 %v1349, %v1348
        %v1363 = vpack.c.b16 %v1351, %v1350
        %v1364 = vpack.c.b16 %v1353, %v1352
        %v1365 = vpack.c.b16 %v1355, %v1354
        %v1366 = vpack.c.b16 %v1357, %v1356
        %v1367 = vpack.c.b16 %v1359, %v1358
        %1376 = vmatprep.subr.bf16.mxu0 0
        %1377 = vmatpush1.bf16.msra.mxu0 %v1360
        %1378 = vmatprep.subr.bf16.mxu0 0
        %1379 = vmatpush1.bf16.msra.mxu0 %v1361
        %1380 = vmatprep.subr.bf16.mxu0 0
        %1381 = vmatpush1.bf16.msra.mxu0 %v1362
        %1382 = vmatprep.subr.bf16.mxu0 0
        %1383 = vmatpush1.bf16.msra.mxu0 %v1363
        %1384 = vmatprep.subr.bf16.mxu0 0
        %1385 = vmatpush1.bf16.msra.mxu0 %v1364
        %1386 = vmatprep.subr.bf16.mxu0 0
        %1387 = vmatpush1.bf16.msra.mxu0 %v1365
        %1388 = vmatprep.subr.bf16.mxu0 0
        %1389 = vmatpush1.bf16.msra.mxu0 %v1366
        %1390 = vmatprep.subr.bf16.mxu0 0
        %1391 = vmatpush1.bf16.msra.mxu0 %v1367
        %1392 = vmatprep.subr.bf16.mxu0 0
        %1393 = vmatpush1.bf16.msra.mxu0 0
        %1394 = vmatprep.subr.bf16.mxu0 0
        %1395 = vmatpush1.bf16.msra.mxu0 0
        %1396 = vmatprep.subr.bf16.mxu0 0
        %1397 = vmatpush1.bf16.msra.mxu0 0
        %1398 = vmatprep.subr.bf16.mxu0 0
        %1399 = vmatpush1.bf16.msra.mxu0 0
        %1400 = vmatprep.subr.bf16.mxu0 0
        %1401 = vmatpush1.bf16.msra.mxu0 0
        %1402 = vmatprep.subr.bf16.mxu0 0
        %1403 = vmatpush1.bf16.msra.mxu0 0
        %1404 = vmatprep.subr.bf16.mxu0 0
        %1405 = vmatpush1.bf16.msra.mxu0 0
        %1406 = vmatprep.subr.bf16.mxu0 0
        %1407 = vmatpush1.bf16.msra.mxu0 0
        %1408 = vmatprep.mubr.bf16.mxu0 0
        %1409 = vmatmul.mubr.bf16.gmra.mrb[0].mxu0 %v1310
        %v1410 = vpop.f32.mrb[0].mxu0
        %v1411 = vadd.f32 0.0, %v1410
        %v1412 = vpop.f32.mrb[0].mxu0
        %v1413 = vpop.f32.mrb[0].mxu0
        %v1414 = vpop.f32.mrb[0].mxu0
        %1415 = vdwg.mxu0
        %v1416 = vadd.f32 %v1308, %v1411
        %s1417 = scalar_lea.vmem [#allocation8], 512
        %v1418 = vld [vmem:[%s1417] sm:$0xf]
        %v1419 = vld [vmem:[%s1417 + $0x4] sm:$0xf]
        %v1420 = vld [vmem:[%s1417 + $0x8] sm:$0xf]
        %v1421 = vld [vmem:[%s1417 + $0xc] sm:$0xf]
        %v1422 = vld [vmem:[%s1417 + $0x10] sm:$0xf]
        %v1423 = vld [vmem:[%s1417 + $0x14] sm:$0xf]
        %v1424 = vld [vmem:[%s1417 + $0x18] sm:$0xf]
        %v1425 = vld [vmem:[%s1417 + $0x1c] sm:$0xf]
        %v1426 = vld [vmem:[%s1417 + $0x20] sm:$0xf]
        %v1427 = vld [vmem:[%s1417 + $0x24] sm:$0xf]
        %v1428 = vld [vmem:[%s1417 + $0x28] sm:$0xf]
        %v1429 = vld [vmem:[%s1417 + $0x2c] sm:$0xf]
        %v1430 = vld [vmem:[%s1417 + $0x30] sm:$0xf]
        %v1431 = vld [vmem:[%s1417 + $0x34] sm:$0xf]
        %v1432 = vld [vmem:[%s1417 + $0x38] sm:$0xf]
        %v1433 = vld [vmem:[%s1417 + $0x3c] sm:$0xf]
        %v1436 = vunpack.c.l.s4 1983009808
        %v1437 = vunpack.c.0.s8 %v1436
        %v1438 = vlaneseq
        %v1439 = vshrl.u32 %v1438, 7
        %v1440 = vsub.s32 %v1437, %v1439
        %v1441 = vrot.slane %v1202, %v1440
        %v1443 = vshrl.u32 %v1441, 16
        %v1445 = vshll.u32 %v1441, 16
        %v1447 = vrot.slane %v1445, 1
        %v1448 = vor.u32 %v1443, %v1447
        %v1466 = vunpack.c.l.b16 %v1418
        %v1467 = vunpack.c.l.b16 %v1419
        %v1468 = vunpack.c.l.b16 %v1420
        %v1469 = vunpack.c.l.b16 %v1421
        %v1470 = vunpack.c.l.b16 %v1422
        %v1471 = vunpack.c.l.b16 %v1423
        %v1472 = vunpack.c.l.b16 %v1424
        %v1473 = vunpack.c.l.b16 %v1425
        %v1474 = vunpack.c.l.b16 %v1426
        %v1475 = vunpack.c.l.b16 %v1427
        %v1476 = vunpack.c.l.b16 %v1428
        %v1477 = vunpack.c.l.b16 %v1429
        %v1478 = vunpack.c.l.b16 %v1430
        %v1479 = vunpack.c.l.b16 %v1431
        %v1480 = vunpack.c.l.b16 %v1432
        %v1481 = vunpack.c.l.b16 %v1433
        %v1482 = vpack.c.b16 %v1467, %v1466
        %v1483 = vpack.c.b16 %v1469, %v1468
        %v1484 = vpack.c.b16 %v1471, %v1470
        %v1485 = vpack.c.b16 %v1473, %v1472
        %v1486 = vpack.c.b16 %v1475, %v1474
        %v1487 = vpack.c.b16 %v1477, %v1476
        %v1488 = vpack.c.b16 %v1479, %v1478
        %v1489 = vpack.c.b16 %v1481, %v1480
        %1498 = vmatprep.subr.bf16.mxu0 0
        %1499 = vmatpush1.bf16.msra.mxu0 %v1482
        %1500 = vmatprep.subr.bf16.mxu0 0
        %1501 = vmatpush1.bf16.msra.mxu0 %v1483
        %1502 = vmatprep.subr.bf16.mxu0 0
        %1503 = vmatpush1.bf16.msra.mxu0 %v1484
        %1504 = vmatprep.subr.bf16.mxu0 0
        %1505 = vmatpush1.bf16.msra.mxu0 %v1485
        %1506 = vmatprep.subr.bf16.mxu0 0
        %1507 = vmatpush1.bf16.msra.mxu0 %v1486
        %1508 = vmatprep.subr.bf16.mxu0 0
        %1509 = vmatpush1.bf16.msra.mxu0 %v1487
        %1510 = vmatprep.subr.bf16.mxu0 0
        %1511 = vmatpush1.bf16.msra.mxu0 %v1488
        %1512 = vmatprep.subr.bf16.mxu0 0
        %1513 = vmatpush1.bf16.msra.mxu0 %v1489
        %1514 = vmatprep.subr.bf16.mxu0 0
        %1515 = vmatpush1.bf16.msra.mxu0 0
        %1516 = vmatprep.subr.bf16.mxu0 0
        %1517 = vmatpush1.bf16.msra.mxu0 0
        %1518 = vmatprep.subr.bf16.mxu0 0
        %1519 = vmatpush1.bf16.msra.mxu0 0
        %1520 = vmatprep.subr.bf16.mxu0 0
        %1521 = vmatpush1.bf16.msra.mxu0 0
        %1522 = vmatprep.subr.bf16.mxu0 0
        %1523 = vmatpush1.bf16.msra.mxu0 0
        %1524 = vmatprep.subr.bf16.mxu0 0
        %1525 = vmatpush1.bf16.msra.mxu0 0
        %1526 = vmatprep.subr.bf16.mxu0 0
        %1527 = vmatpush1.bf16.msra.mxu0 0
        %1528 = vmatprep.subr.bf16.mxu0 0
        %1529 = vmatpush1.bf16.msra.mxu0 0
        %1530 = vmatprep.mubr.bf16.mxu0 0
        %1531 = vmatmul.mubr.bf16.gmra.mrb[0].mxu0 %v1448
        %v1532 = vpop.f32.mrb[0].mxu0
        %v1533 = vadd.f32 0.0, %v1532
        %v1534 = vpop.f32.mrb[0].mxu0
        %v1535 = vpop.f32.mrb[0].mxu0
        %v1536 = vpop.f32.mrb[0].mxu0
        %1537 = vdwg.mxu0
        %v1538 = vadd.f32 %v1416, %v1533
        %v1539 = vmax.f32 %v1538, 0.0
        %v1540 = vpack.c.bf16 %v1539, %v1539
        %v1541 = vld [vmem:[%s462] sm:$0xf]
        %v1542 = vld [vmem:[%s462 + $0x4] sm:$0xf]
        %v1543 = vld [vmem:[%s462 + $0x8] sm:$0xf]
        %v1544 = vld [vmem:[%s462 + $0xc] sm:$0xf]
        %v1545 = vld [vmem:[%s462 + $0x10] sm:$0xf]
        %v1546 = vld [vmem:[%s462 + $0x14] sm:$0xf]
        %v1547 = vld [vmem:[%s462 + $0x18] sm:$0xf]
        %v1548 = vld [vmem:[%s462 + $0x1c] sm:$0xf]
        %v1549 = vld [vmem:[%s462 + $0x20] sm:$0xf]
        %v1550 = vld [vmem:[%s462 + $0x24] sm:$0xf]
        %v1551 = vld [vmem:[%s462 + $0x28] sm:$0xf]
        %v1552 = vld [vmem:[%s462 + $0x2c] sm:$0xf]
        %v1553 = vld [vmem:[%s462 + $0x30] sm:$0xf]
        %v1554 = vld [vmem:[%s462 + $0x34] sm:$0xf]
        %v1555 = vld [vmem:[%s462 + $0x38] sm:$0xf]
        %v1556 = vld [vmem:[%s462 + $0x3c] sm:$0xf]
        %v1573 = vunpack.c.l.b16 %v1541
        %v1574 = vunpack.c.l.b16 %v1542
        %v1575 = vunpack.c.l.b16 %v1543
        %v1576 = vunpack.c.l.b16 %v1544
        %v1577 = vunpack.c.l.b16 %v1545
        %v1578 = vunpack.c.l.b16 %v1546
        %v1579 = vunpack.c.l.b16 %v1547
        %v1580 = vunpack.c.l.b16 %v1548
        %v1581 = vunpack.c.l.b16 %v1549
        %v1582 = vunpack.c.l.b16 %v1550
        %v1583 = vunpack.c.l.b16 %v1551
        %v1584 = vunpack.c.l.b16 %v1552
        %v1585 = vunpack.c.l.b16 %v1553
        %v1586 = vunpack.c.l.b16 %v1554
        %v1587 = vunpack.c.l.b16 %v1555
        %v1588 = vunpack.c.l.b16 %v1556
        %v1589 = vpack.c.b16 %v1574, %v1573
        %v1590 = vpack.c.b16 %v1576, %v1575
        %v1591 = vpack.c.b16 %v1578, %v1577
        %v1592 = vpack.c.b16 %v1580, %v1579
        %v1593 = vpack.c.b16 %v1582, %v1581
        %v1594 = vpack.c.b16 %v1584, %v1583
        %v1595 = vpack.c.b16 %v1586, %v1585
        %v1596 = vpack.c.b16 %v1588, %v1587
        %1605 = vmatprep.subr.bf16.mxu0 0
        %1606 = vmatpush1.bf16.msra.mxu0 %v1589
        %1607 = vmatprep.subr.bf16.mxu0 0
        %1608 = vmatpush1.bf16.msra.mxu0 %v1590
        %1609 = vmatprep.subr.bf16.mxu0 0
        %1610 = vmatpush1.bf16.msra.mxu0 %v1591
        %1611 = vmatprep.subr.bf16.mxu0 0
        %1612 = vmatpush1.bf16.msra.mxu0 %v1592
        %1613 = vmatprep.subr.bf16.mxu0 0
        %1614 = vmatpush1.bf16.msra.mxu0 %v1593
        %1615 = vmatprep.subr.bf16.mxu0 0
        %1616 = vmatpush1.bf16.msra.mxu0 %v1594
        %1617 = vmatprep.subr.bf16.mxu0 0
        %1618 = vmatpush1.bf16.msra.mxu0 %v1595
        %1619 = vmatprep.subr.bf16.mxu0 0
        %1620 = vmatpush1.bf16.msra.mxu0 %v1596
        %1621 = vmatprep.subr.bf16.mxu0 0
        %1622 = vmatpush1.bf16.msra.mxu0 0
        %1623 = vmatprep.subr.bf16.mxu0 0
        %1624 = vmatpush1.bf16.msra.mxu0 0
        %1625 = vmatprep.subr.bf16.mxu0 0
        %1626 = vmatpush1.bf16.msra.mxu0 0
        %1627 = vmatprep.subr.bf16.mxu0 0
        %1628 = vmatpush1.bf16.msra.mxu0 0
        %1629 = vmatprep.subr.bf16.mxu0 0
        %1630 = vmatpush1.bf16.msra.mxu0 0
        %1631 = vmatprep.subr.bf16.mxu0 0
        %1632 = vmatpush1.bf16.msra.mxu0 0
        %1633 = vmatprep.subr.bf16.mxu0 0
        %1634 = vmatpush1.bf16.msra.mxu0 0
        %1635 = vmatprep.subr.bf16.mxu0 0
        %1636 = vmatpush1.bf16.msra.mxu0 0
        %1637 = vmatprep.mubr.bf16.mxu0 0
        %1638 = vmatmul.mubr.bf16.gmra.mrb[0].mxu0 %v1540
        %v1639 = vpop.f32.mrb[0].mxu0
        %v1640 = vadd.f32 0.0, %v1639
        %v1641 = vpop.f32.mrb[0].mxu0
        %v1642 = vpop.f32.mrb[0].mxu0
        %v1643 = vpop.f32.mrb[0].mxu0
        %1644 = vdwg.mxu0
        %p1645 = scmp.eq.s32.totalorder %s38, 0
        // Predicated region
        $region85: #{conv2d_subsampling_forward.3} parent=51 // pred_check
          %p1646 = pneg %p1645
        $region86: #{conv2d_subsampling_forward.3} parent=51 // pred_check_branch
          %1648 = sbr.rel (%p1646) target = $region88
        $region87: #{conv2d_subsampling_forward.3} parent=51 // pred_region
          %1649 = vst [vmem:[%s517] sm:$0x7] %v1640
        $region88: #{conv2d_subsampling_forward.3} parent=51 // pred_fallthru
          _
        %p1650 = scmp.gt.s32.totalorder %s38, 0
        // Predicated region
        $region89: #{conv2d_subsampling_forward.3} parent=51 // pred_check
          %p1651 = pneg %p1650
        $region90: #{conv2d_subsampling_forward.3} parent=51 // pred_check_branch
          %1653 = sbr.rel (%p1651) target = $region92
        $region91: #{conv2d_subsampling_forward.3} parent=51 // pred_region
          %v1654 = vld [vmem:[%s517] sm:$0x7]
          %v1655 = vadd.f32 %v1654, %v1640
          %1656 = vst [vmem:[%s517] sm:$0x7] %v1655
        $region92: #{conv2d_subsampling_forward.3} parent=51 // pred_fallthru
          _
        %p1657 = scmp.eq.s32.totalorder %s38, 2
        // Predicated region
        $region93: #{conv2d_subsampling_forward.3} parent=51 // pred_check
          %p1658 = pneg %p1657
        $region94: #{conv2d_subsampling_forward.3} parent=51 // pred_check_branch
          %1660 = sbr.rel (%p1658) target = $region96
        $region95: #{conv2d_subsampling_forward.3} parent=51 // pred_region
          %v1661 = vld [vmem:[%s517] sm:$0x7]
          %v1662 = vld [vmem:[#allocation13] sm:$0x1]
          %v1664 = vlaneseq
          %v1665 = vshrl.u32 %v1664, 7
          %v1666 = vsub.s32 0, %v1665
          %v1667 = vrot.slane %v1662, %v1666
          %v1669 = vadd.f32 %v1661, %v1667
          %v1670 = vmul.f32 %v1669, 5.656854
          %v1671 = vld [vmem:[#allocation14] sm:$0x7]
          %v1672 = vadd.f32 %v1670, %v1671
          %1673 = vst [vmem:[%s517] sm:$0x7] %v1672
        $region96: #{conv2d_subsampling_forward.3} parent=51 // pred_fallthru
          _
        %s1674 = sand.u32 %s249, 1
        %s1675 = scalar_lea.sflag [#allocation4], %s1674
        %s1676 = sand.u32 %s249, 1
        %s1677 = smul.addr %s1676, 4
        %s1678 = scalar_lea.vmem [#allocation16], %s1677
        // Predicated region
        $region97: #{conv2d_subsampling_forward.3} parent=51 // pred_check
          %p1679 = pneg %p259
        $region98: #{conv2d_subsampling_forward.3} parent=51 // pred_check_branch
          %1681 = sbr.rel (%p1679) target = $region100
        $region99: #{conv2d_subsampling_forward.3} parent=51 // pred_region
          %s1683 = ssub.s32 64, 64
          %1684 = vsyncadd %s1675, %s1683
          %s1685 = smul.addr %s37, 64
          %s1686 = scalar_lea.hbm %s8, %s1685
          %s1688 = sshll.u32 %s1678, 4
          %s1689 = int_to_ptr.vmem [resolvable:$true] %s1688
          %1691 = dma.vmem_to_hbm [thread:$0]  %s1689, 64, %s1686, %s1675
        $region100: #{conv2d_subsampling_forward.3} parent=51 // pred_fallthru
          _
      $region52: #{conv2d_subsampling_forward.3} parent=5 // pred_fallthru
        _
      %p1692 = scmp.le.s32.totalorder 2, %s28
      // Predicated region
      $region101: #{conv2d_subsampling_forward.3} parent=5 // pred_check
        %p1693 = pneg %p1692
      $region102: #{conv2d_subsampling_forward.3} parent=5 // pred_check_branch
        %1695 = sbr.rel (%p1693) target = $region104
      $region103: #{conv2d_subsampling_forward.3} parent=5 // pred_region
        %s1696 = ssub.s32 %s28, 2
        // Predicated region
        $region105: #{conv2d_subsampling_forward.3} parent=103 // pred_check
          %p1697 = pneg %p265
        $region106: #{conv2d_subsampling_forward.3} parent=103 // pred_check_branch
          %1699 = sbr.rel (%p1697) target = $region108
        $region107: #{conv2d_subsampling_forward.3} parent=103 // pred_region
          %s1700 = sand.u32 %s250, 1
          %s1701 = scalar_lea.sflag [#allocation4], %s1700
          %s1702 = sand.u32 %s250, 1
          %s1703 = smul.addr %s1702, 4
          %s1704 = scalar_lea.vmem [#allocation16], %s1703
          %1705 = dma.done %s1701, 64
        $region108: #{conv2d_subsampling_forward.3} parent=103 // pred_fallthru
          _
      $region104: #{conv2d_subsampling_forward.3} parent=5 // pred_fallthru
        _
    $region6: #{conv2d_subsampling_forward.3} parent=1 // loop_footer
      %s32 = sadd.s32 1, %s28
    $region7: #{conv2d_subsampling_forward.3} parent=1 // loop_footer_branch
      %27 = sbr.rel target = $region3
    $region8: #{conv2d_subsampling_forward.3} parent=1 // loop_exit
      _
    %1706 = vsyncpa [#allocation3], 1
    %s1707 = scalar_lea.sflag [#allocation3], 1
    %1708 = vsyncpa %s1707, 1
    %1709 = vsyncpa [#allocation6], 1
    %s1710 = scalar_lea.sflag [#allocation6], 1
    %1711 = vsyncpa %s1710, 1
    %1712 = vsyncpa [#allocation9], 1
    %1713 = vsyncpa [#allocation12], 1
    %s1714 = scalar_lea.sflag [#allocation12], 1
    %1715 = vsyncpa %s1714, 1
    %1716 = vsyncpa [#allocation15], 1
    %1717 = vsyncpa [#allocation4], 1
    %s1718 = scalar_lea.sflag [#allocation4], 1
    %1719 = vsyncpa %s1718, 1

</llo_original>
